<compile_context>
chip_gen: v7x
topology: tpu7x:2x2x1
jax: 0.10.0
libtpu: 0.0.40
codegen_flags: <defaults>
</compile_context>

<pallas_src>
import functools

import jax
import jax.numpy as jnp
from jax.experimental import pallas as pl
from jax.experimental.pallas import tpu as pltpu

X_DIM = 784    # fixed by x.view(-1, 784) in the PyTorch forward
H_DIM1 = 256
H_DIM2 = 128
Z_DIM = 32
HEAD_DIM = 128  # fused mu|log_var head, padded 2*Z_DIM -> 128 lanes


def vae_forward_kernel(x_ref, eps_ref,
                       w1_ref, b1_ref, w2_ref, b2_ref,
                       w3_ref, b3_ref,           # fused + lane-padded fc31|fc32
                       w4_ref, b4_ref, w5_ref, b5_ref, w6_ref, b6_ref,
                       recon_ref, muvar_ref):
    # ---- encoder (bf16 MXU operands, f32 accumulation / elementwise) ----
    x = x_ref[...].astype(jnp.bfloat16)
    h1 = jnp.maximum(
        jnp.dot(x, w1_ref[...], preferred_element_type=jnp.float32) + b1_ref[...], 0.0)
    h2 = jnp.maximum(
        jnp.dot(h1.astype(jnp.bfloat16), w2_ref[...],
                preferred_element_type=jnp.float32) + b2_ref[...], 0.0)

    # fused mu | log_var | zero-pad head: one (tile,128) x (128,128) matmul.
    # Columns [0:32] = mu, [32:64] = log_var, [64:128] = exact zeros.
    muvar = jnp.dot(h2.astype(jnp.bfloat16), w3_ref[...],
                    preferred_element_type=jnp.float32) + b3_ref[...]
    mu = muvar[:, :Z_DIM]
    log_var = muvar[:, Z_DIM:2 * Z_DIM]

    # ---- reparameterization (eps supplied from outside, deterministic) ----
    # Padded batch rows only ever see bias-valued log_var (bounded PyTorch-style
    # init), so exp() here cannot overflow; those rows are sliced off outside.
    std = jnp.exp(0.5 * log_var)
    z = eps_ref[...] * std + mu

    # ---- decoder ----
    d1 = jnp.maximum(
        jnp.dot(z.astype(jnp.bfloat16), w4_ref[...],
                preferred_element_type=jnp.float32) + b4_ref[...], 0.0)
    d2 = jnp.maximum(
        jnp.dot(d1.astype(jnp.bfloat16), w5_ref[...],
                preferred_element_type=jnp.float32) + b5_ref[...], 0.0)
    logits = jnp.dot(d2.astype(jnp.bfloat16), w6_ref[...],
                     preferred_element_type=jnp.float32) + b6_ref[...]

    # sigmoid(x) = 1 / (1 + exp(-x)); exp + approx reciprocal both run on the
    # EUP slot and co-issue with MXU/VPU work instead of a full VPU divide.
    recon_ref[...] = pl.reciprocal(1.0 + jnp.exp(-logits), approx=True)
    muvar_ref[...] = muvar


def init_linear(key, in_dim, out_dim):
    """Deterministic PyTorch-style Linear init: U(-1/sqrt(in), 1/sqrt(in))."""
    kw, kb = jax.random.split(key)
    bound = 1.0 / jnp.sqrt(jnp.float32(in_dim))
    # stored already transposed: (in, out); weights bf16 (MXU operand dtype)
    w = jax.random.uniform(kw, (in_dim, out_dim), jnp.float32, -bound, bound)
    b = jax.random.uniform(kb, (1, out_dim), jnp.float32, -bound, bound)
    return w.astype(jnp.bfloat16), b


def make_vae_params(key, x_dim=X_DIM, h_dim1=H_DIM1, h_dim2=H_DIM2, z_dim=Z_DIM):
    keys = jax.random.split(key, 7)
    w1, b1 = init_linear(keys[0], x_dim, h_dim1)
    w2, b2 = init_linear(keys[1], h_dim1, h_dim2)
    w31, b31 = init_linear(keys[2], h_dim2, z_dim)
    w32, b32 = init_linear(keys[3], h_dim2, z_dim)
    w4, b4 = init_linear(keys[4], z_dim, h_dim2)
    w5, b5 = init_linear(keys[5], h_dim2, h_dim1)
    w6, b6 = init_linear(keys[6], h_dim1, x_dim)
    # Fuse the two latent heads and pad to a full 128-lane output so the
    # muvar store is unmasked and the head matmul is (tile,128)x(128,128).
    pad_w = jnp.zeros((h_dim2, HEAD_DIM - 2 * z_dim), jnp.bfloat16)
    pad_b = jnp.zeros((1, HEAD_DIM - 2 * z_dim), jnp.float32)
    w3 = jnp.concatenate([w31, w32, pad_w], axis=1)   # (h_dim2, 128), bf16
    b3 = jnp.concatenate([b31, b32, pad_b], axis=1)   # (1, 128), f32
    return (w1, b1, w2, b2, w3, b3, w4, b4, w5, b5, w6, b6)


def _round_up(n, m):
    return -(-n // m) * m


@functools.partial(jax.jit, static_argnames=("tile_b",))
def vae_forward(x, eps, params, *, tile_b=256):
    """x: (B, 1, 28, 28) or (B, 784). eps: (B, Z_DIM) ~ N(0,1).

    tile_b=256 fills the v6e/v7x 2x256x256 MXU M dimension and halves grid-step
    overhead vs 128; for small batches the tile is shrunk (multiple of 8) and,
    when possible, split into >=2 grid steps so both v7x TensorCores get work.
    """
    B = x.shape[0]
    x_flat = x.reshape(B, X_DIM)
    if x_flat.dtype not in (jnp.float32, jnp.bfloat16):
        x_flat = x_flat.astype(jnp.float32)
    eps_f = eps.astype(jnp.float32)

    # ---- choose batch tile (static, shapes are known at trace time) ----
    b8 = _round_up(B, 8)                      # sublane multiple
    if b8 <= tile_b:
        # small batch: two grid steps (if we have >=16 rows) for the v7x 2-TC
        # split; tile stays a multiple of 8 rows.
        tile = _round_up(b8 // 2, 8) if b8 >= 16 else b8
    else:
        tile = tile_b
    b_pad = _round_up(b8, tile)
    if b_pad != B:
        x_flat = jnp.pad(x_flat, ((0, b_pad - B), (0, 0)))
        eps_f = jnp.pad(eps_f, ((0, b_pad - B), (0, 0)))
    grid = (b_pad // tile,)

    def batch_spec(width):
        return pl.BlockSpec((tile, width), lambda i: (i, 0))

    def resident_spec(p):
        # constant block index => weight/bias stays resident in VMEM, no re-DMA
        return pl.BlockSpec(p.shape, lambda i: (0, 0))

    in_specs = [batch_spec(X_DIM), batch_spec(Z_DIM)]
    in_specs += [resident_spec(p) for p in params]
    out_specs = (batch_spec(X_DIM), batch_spec(HEAD_DIM))
    out_shape = (
        jax.ShapeDtypeStruct((b_pad, X_DIM), jnp.float32),     # recon
        jax.ShapeDtypeStruct((b_pad, HEAD_DIM), jnp.float32),  # mu | log_var | 0
    )

    # Advisory cost hint for XLA scheduling of the custom call.
    flops = 2 * b_pad * (X_DIM * H_DIM1 + H_DIM1 * H_DIM2 + H_DIM2 * HEAD_DIM
                         + Z_DIM * H_DIM2 + H_DIM2 * H_DIM1 + H_DIM1 * X_DIM)
    transcendentals = b_pad * (Z_DIM + 2 * X_DIM)
    bytes_accessed = (sum(int(p.size) * p.dtype.itemsize for p in params)
                      + b_pad * X_DIM * (x_flat.dtype.itemsize + 4)  # x in + recon out
                      + b_pad * Z_DIM * 4                            # eps in
                      + b_pad * HEAD_DIM * 4)                        # muvar out

    recon, muvar = pl.pallas_call(
        vae_forward_kernel,
        out_shape=out_shape,
        grid=grid,
        in_specs=in_specs,
        out_specs=out_specs,
        compiler_params=pltpu.CompilerParams(
            # batch axis is embarrassingly parallel -> both TCs on v7x
            dimension_semantics=("parallel",),
            # 256-row f32 tiles + double buffers + ~1 MiB resident weights fit
            # easily in 32 MiB; raised above v5e's 16 MiB default to be safe.
            vmem_limit_bytes=32 * 1024 * 1024,
        ),
        cost_estimate=pl.CostEstimate(
            flops=flops,
            transcendentals=transcendentals,
            bytes_accessed=bytes_accessed,
        ),
    )(x_flat, eps_f, *params)

    recon = recon[:B]
    mu = muvar[:B, :Z_DIM]
    log_var = muvar[:B, Z_DIM:2 * Z_DIM]
    return recon, mu, log_var


def vae_forward_ref(x, eps, params):
    """Pure-JAX f32 reference of the PyTorch forward (same eps, same params)."""
    (w1, b1, w2, b2, w3, b3, w4, b4, w5, b5, w6, b6) = [
        p.astype(jnp.float32) for p in params
    ]
    B = x.shape[0]
    xf = x.reshape(B, X_DIM).astype(jnp.float32)
    h = jax.nn.relu(xf @ w1 + b1)
    h = jax.nn.relu(h @ w2 + b2)
    muvar = h @ w3 + b3
    mu, log_var = muvar[:, :Z_DIM], muvar[:, Z_DIM:2 * Z_DIM]
    z = eps * jnp.exp(0.5 * log_var) + mu
    h = jax.nn.relu(z @ w4 + b4)
    h = jax.nn.relu(h @ w5 + b5)
    recon = jax.nn.sigmoid(h @ w6 + b6)
    return recon, mu, log_var


if __name__ == "__main__":
    key = jax.random.PRNGKey(0)
    k_params, k_x, k_eps = jax.random.split(key, 3)

    B = 8
    params = make_vae_params(k_params)
    # FashionMNIST-like input, NCHW; flattened to (B, 784) inside the wrapper.
    # TODO(synk): torch.randn_like(eps) inside sampling() is replaced by an
    # explicit eps input so the forward is deterministic and testable.
    x = jax.random.normal(k_x, (B, 1, 28, 28), jnp.float32)
    eps = jax.random.normal(k_eps, (B, Z_DIM), jnp.float32)

    recon, mu, log_var = jax.block_until_ready(vae_forward(x, eps, params))

    # sanity check against pure-JAX f32 reference (bf16 matmul operands and
    # approx reciprocal in the kernel => loosened tolerance)
    r_ref, mu_ref, lv_ref = vae_forward_ref(x, eps, params)
    assert recon.shape == (B, X_DIM) and mu.shape == (B, Z_DIM) and log_var.shape == (B, Z_DIM)
    assert jnp.allclose(recon, r_ref, atol=5e-2, rtol=5e-2)
    assert jnp.allclose(mu, mu_ref, atol=5e-2, rtol=5e-2)
    assert jnp.allclose(log_var, lv_ref, atol=5e-2, rtol=5e-2)

    print("KERNEL_OK")
</pallas_src>

<mosaic_0001>
module attributes {stable_mosaic.version = 11 : i64} {
  func.func @vae_forward_kernel(%arg0: i32, %arg1: memref<8x784xf32, #tpu.memory_space<vmem>>, %arg2: memref<8x32xf32, #tpu.memory_space<vmem>>, %arg3: memref<784x256xbf16, #tpu.memory_space<vmem>>, %arg4: memref<1x256xf32, #tpu.memory_space<vmem>>, %arg5: memref<256x128xbf16, #tpu.memory_space<vmem>>, %arg6: memref<1x128xf32, #tpu.memory_space<vmem>>, %arg7: memref<128x128xbf16, #tpu.memory_space<vmem>>, %arg8: memref<1x128xf32, #tpu.memory_space<vmem>>, %arg9: memref<32x128xbf16, #tpu.memory_space<vmem>>, %arg10: memref<1x128xf32, #tpu.memory_space<vmem>>, %arg11: memref<128x256xbf16, #tpu.memory_space<vmem>>, %arg12: memref<1x256xf32, #tpu.memory_space<vmem>>, %arg13: memref<256x784xbf16, #tpu.memory_space<vmem>>, %arg14: memref<1x784xf32, #tpu.memory_space<vmem>>, %arg15: memref<8x784xf32, #tpu.memory_space<vmem>>, %arg16: memref<8x128xf32, #tpu.memory_space<vmem>>) attributes {dimension_semantics = [#tpu.dimension_semantics<parallel>], iteration_bounds = array<i64: 1>, scalar_prefetch = 0 : i64, scratch_operands = 0 : i64, tpu.core_type = #tpu.core_type<tc>, window_params = [{transform_indices = @transform_0, window_bounds = array<i64: 8, 784>}, {transform_indices = @transform_1, window_bounds = array<i64: 8, 32>}, {pipeline_mode = #tpu.pipeline_mode<synchronous>, transform_indices = @transform_2, window_bounds = array<i64: 784, 256>}, {pipeline_mode = #tpu.pipeline_mode<synchronous>, transform_indices = @transform_3, window_bounds = array<i64: 1, 256>}, {pipeline_mode = #tpu.pipeline_mode<synchronous>, transform_indices = @transform_4, window_bounds = array<i64: 256, 128>}, {pipeline_mode = #tpu.pipeline_mode<synchronous>, transform_indices = @transform_5, window_bounds = array<i64: 1, 128>}, {pipeline_mode = #tpu.pipeline_mode<synchronous>, transform_indices = @transform_6, window_bounds = array<i64: 128, 128>}, {pipeline_mode = #tpu.pipeline_mode<synchronous>, transform_indices = @transform_7, window_bounds = array<i64: 1, 128>}, {pipeline_mode = #tpu.pipeline_mode<synchronous>, transform_indices = @transform_8, window_bounds = array<i64: 32, 128>}, {pipeline_mode = #tpu.pipeline_mode<synchronous>, transform_indices = @transform_9, window_bounds = array<i64: 1, 128>}, {pipeline_mode = #tpu.pipeline_mode<synchronous>, transform_indices = @transform_10, window_bounds = array<i64: 128, 256>}, {pipeline_mode = #tpu.pipeline_mode<synchronous>, transform_indices = @transform_11, window_bounds = array<i64: 1, 256>}, {pipeline_mode = #tpu.pipeline_mode<synchronous>, transform_indices = @transform_12, window_bounds = array<i64: 256, 784>}, {pipeline_mode = #tpu.pipeline_mode<synchronous>, transform_indices = @transform_13, window_bounds = array<i64: 1, 784>}, {transform_indices = @transform_14, window_bounds = array<i64: 8, 784>}, {transform_indices = @transform_15, window_bounds = array<i64: 8, 128>}]} {
    %c0 = arith.constant 0 : index
    %c0_0 = arith.constant 0 : index
    %0 = vector.load %arg1[%c0, %c0_0] : memref<8x784xf32, #tpu.memory_space<vmem>>, vector<8x784xf32>
    %1 = arith.truncf %0 : vector<8x784xf32> to vector<8x784xbf16>
    %c0_1 = arith.constant 0 : index
    %c0_2 = arith.constant 0 : index
    %2 = vector.load %arg3[%c0_1, %c0_2] : memref<784x256xbf16, #tpu.memory_space<vmem>>, vector<784x256xbf16>
    %cst = arith.constant dense<0.000000e+00> : vector<8x256xf32>
    %3 = tpu.matmul %1, %2, %cst {dimension_numbers = #tpu.dot_dimension_numbers<[1], [0], [0], [1], [0, 0, 1, 1], [], []>} : vector<8x784xbf16>, vector<784x256xbf16>, vector<8x256xf32> -> vector<8x256xf32>
    %c0_3 = arith.constant 0 : index
    %c0_4 = arith.constant 0 : index
    %4 = vector.load %arg4[%c0_3, %c0_4] : memref<1x256xf32, #tpu.memory_space<vmem>>, vector<1x256xf32>
    %5 = vector.broadcast %4 : vector<1x256xf32> to vector<8x256xf32>
    %6 = arith.addf %3, %5 : vector<8x256xf32>
    %cst_5 = arith.constant 0.000000e+00 : f32
    %7 = vector.broadcast %cst_5 : f32 to vector<8x256xf32>
    %8 = arith.maximumf %6, %7 : vector<8x256xf32>
    %9 = arith.truncf %8 : vector<8x256xf32> to vector<8x256xbf16>
    %c0_6 = arith.constant 0 : index
    %c0_7 = arith.constant 0 : index
    %10 = vector.load %arg5[%c0_6, %c0_7] : memref<256x128xbf16, #tpu.memory_space<vmem>>, vector<256x128xbf16>
    %cst_8 = arith.constant dense<0.000000e+00> : vector<8x128xf32>
    %11 = tpu.matmul %9, %10, %cst_8 {dimension_numbers = #tpu.dot_dimension_numbers<[1], [0], [0], [1], [0, 0, 1, 1], [], []>} : vector<8x256xbf16>, vector<256x128xbf16>, vector<8x128xf32> -> vector<8x128xf32>
    %c0_9 = arith.constant 0 : index
    %c0_10 = arith.constant 0 : index
    %12 = vector.load %arg6[%c0_9, %c0_10] : memref<1x128xf32, #tpu.memory_space<vmem>>, vector<1x128xf32>
    %13 = vector.broadcast %12 : vector<1x128xf32> to vector<8x128xf32>
    %14 = arith.addf %11, %13 : vector<8x128xf32>
    %cst_11 = arith.constant 0.000000e+00 : f32
    %15 = vector.broadcast %cst_11 : f32 to vector<8x128xf32>
    %16 = arith.maximumf %14, %15 : vector<8x128xf32>
    %17 = arith.truncf %16 : vector<8x128xf32> to vector<8x128xbf16>
    %c0_12 = arith.constant 0 : index
    %c0_13 = arith.constant 0 : index
    %18 = vector.load %arg7[%c0_12, %c0_13] : memref<128x128xbf16, #tpu.memory_space<vmem>>, vector<128x128xbf16>
    %cst_14 = arith.constant dense<0.000000e+00> : vector<8x128xf32>
    %19 = tpu.matmul %17, %18, %cst_14 {dimension_numbers = #tpu.dot_dimension_numbers<[1], [0], [0], [1], [0, 0, 1, 1], [], []>} : vector<8x128xbf16>, vector<128x128xbf16>, vector<8x128xf32> -> vector<8x128xf32>
    %c0_15 = arith.constant 0 : index
    %c0_16 = arith.constant 0 : index
    %20 = vector.load %arg8[%c0_15, %c0_16] : memref<1x128xf32, #tpu.memory_space<vmem>>, vector<1x128xf32>
    %21 = vector.broadcast %20 : vector<1x128xf32> to vector<8x128xf32>
    %22 = arith.addf %19, %21 : vector<8x128xf32>
    %23 = vector.extract_strided_slice %22 {offsets = [0, 0], sizes = [8, 32], strides = [1, 1]} : vector<8x128xf32> to vector<8x32xf32>
    %24 = vector.extract_strided_slice %22 {offsets = [0, 32], sizes = [8, 32], strides = [1, 1]} : vector<8x128xf32> to vector<8x32xf32>
    %cst_17 = arith.constant 5.000000e-01 : f32
    %25 = vector.broadcast %cst_17 : f32 to vector<8x32xf32>
    %26 = arith.mulf %25, %24 : vector<8x32xf32>
    %27 = math.exp %26 : vector<8x32xf32>
    %c0_18 = arith.constant 0 : index
    %c0_19 = arith.constant 0 : index
    %28 = vector.load %arg2[%c0_18, %c0_19] : memref<8x32xf32, #tpu.memory_space<vmem>>, vector<8x32xf32>
    %29 = arith.mulf %28, %27 : vector<8x32xf32>
    %30 = arith.addf %29, %23 : vector<8x32xf32>
    %31 = arith.truncf %30 : vector<8x32xf32> to vector<8x32xbf16>
    %c0_20 = arith.constant 0 : index
    %c0_21 = arith.constant 0 : index
    %32 = vector.load %arg9[%c0_20, %c0_21] : memref<32x128xbf16, #tpu.memory_space<vmem>>, vector<32x128xbf16>
    %cst_22 = arith.constant dense<0.000000e+00> : vector<8x128xf32>
    %33 = tpu.matmul %31, %32, %cst_22 {dimension_numbers = #tpu.dot_dimension_numbers<[1], [0], [0], [1], [0, 0, 1, 1], [], []>} : vector<8x32xbf16>, vector<32x128xbf16>, vector<8x128xf32> -> vector<8x128xf32>
    %c0_23 = arith.constant 0 : index
    %c0_24 = arith.constant 0 : index
    %34 = vector.load %arg10[%c0_23, %c0_24] : memref<1x128xf32, #tpu.memory_space<vmem>>, vector<1x128xf32>
    %35 = vector.broadcast %34 : vector<1x128xf32> to vector<8x128xf32>
    %36 = arith.addf %33, %35 : vector<8x128xf32>
    %cst_25 = arith.constant 0.000000e+00 : f32
    %37 = vector.broadcast %cst_25 : f32 to vector<8x128xf32>
    %38 = arith.maximumf %36, %37 : vector<8x128xf32>
    %39 = arith.truncf %38 : vector<8x128xf32> to vector<8x128xbf16>
    %c0_26 = arith.constant 0 : index
    %c0_27 = arith.constant 0 : index
    %40 = vector.load %arg11[%c0_26, %c0_27] : memref<128x256xbf16, #tpu.memory_space<vmem>>, vector<128x256xbf16>
    %cst_28 = arith.constant dense<0.000000e+00> : vector<8x256xf32>
    %41 = tpu.matmul %39, %40, %cst_28 {dimension_numbers = #tpu.dot_dimension_numbers<[1], [0], [0], [1], [0, 0, 1, 1], [], []>} : vector<8x128xbf16>, vector<128x256xbf16>, vector<8x256xf32> -> vector<8x256xf32>
    %c0_29 = arith.constant 0 : index
    %c0_30 = arith.constant 0 : index
    %42 = vector.load %arg12[%c0_29, %c0_30] : memref<1x256xf32, #tpu.memory_space<vmem>>, vector<1x256xf32>
    %43 = vector.broadcast %42 : vector<1x256xf32> to vector<8x256xf32>
    %44 = arith.addf %41, %43 : vector<8x256xf32>
    %cst_31 = arith.constant 0.000000e+00 : f32
    %45 = vector.broadcast %cst_31 : f32 to vector<8x256xf32>
    %46 = arith.maximumf %44, %45 : vector<8x256xf32>
    %47 = arith.truncf %46 : vector<8x256xf32> to vector<8x256xbf16>
    %c0_32 = arith.constant 0 : index
    %c0_33 = arith.constant 0 : index
    %48 = vector.load %arg13[%c0_32, %c0_33] : memref<256x784xbf16, #tpu.memory_space<vmem>>, vector<256x784xbf16>
    %cst_34 = arith.constant dense<0.000000e+00> : vector<8x784xf32>
    %49 = tpu.matmul %47, %48, %cst_34 {dimension_numbers = #tpu.dot_dimension_numbers<[1], [0], [0], [1], [0, 0, 1, 1], [], []>} : vector<8x256xbf16>, vector<256x784xbf16>, vector<8x784xf32> -> vector<8x784xf32>
    %c0_35 = arith.constant 0 : index
    %c0_36 = arith.constant 0 : index
    %50 = vector.load %arg14[%c0_35, %c0_36] : memref<1x784xf32, #tpu.memory_space<vmem>>, vector<1x784xf32>
    %51 = vector.broadcast %50 : vector<1x784xf32> to vector<8x784xf32>
    %52 = arith.addf %49, %51 : vector<8x784xf32>
    %cst_37 = arith.constant 0.000000e+00 : f32
    %53 = vector.broadcast %cst_37 : f32 to vector<8x784xf32>
    %54 = arith.subf %53, %52 : vector<8x784xf32>
    %55 = math.exp %54 : vector<8x784xf32>
    %cst_38 = arith.constant 1.000000e+00 : f32
    %56 = vector.broadcast %cst_38 : f32 to vector<8x784xf32>
    %57 = arith.addf %56, %55 : vector<8x784xf32>
    %58 = tpu.reciprocal %57 {approx = true} : vector<8x784xf32> -> vector<8x784xf32>
    %c0_39 = arith.constant 0 : index
    %c0_40 = arith.constant 0 : index
    %59 = vector.load %arg15[%c0_39, %c0_40] : memref<8x784xf32, #tpu.memory_space<vmem>>, vector<8x784xf32>
    tpu.vector_store %arg15[%c0_39, %c0_40], %58 {strides = array<i32>} : memref<8x784xf32, #tpu.memory_space<vmem>>, vector<8x784xf32>,
    %c0_41 = arith.constant 0 : index
    %c0_42 = arith.constant 0 : index
    %60 = vector.load %arg16[%c0_41, %c0_42] : memref<8x128xf32, #tpu.memory_space<vmem>>, vector<8x128xf32>
    tpu.vector_store %arg16[%c0_41, %c0_42], %22 {strides = array<i32>} : memref<8x128xf32, #tpu.memory_space<vmem>>, vector<8x128xf32>,
    return
  }
  func.func @transform_0(%arg0: i32) -> (i32, i32) {
    %c0_i32 = arith.constant 0 : i32
    %c0_i32_0 = arith.constant 0 : i32
    return %arg0, %c0_i32 : i32, i32
  }
  func.func @transform_1(%arg0: i32) -> (i32, i32) {
    %c0_i32 = arith.constant 0 : i32
    %c0_i32_0 = arith.constant 0 : i32
    return %arg0, %c0_i32 : i32, i32
  }
  func.func @transform_2(%arg0: i32) -> (i32, i32) {
    %c0_i32 = arith.constant 0 : i32
    %c0_i32_0 = arith.constant 0 : i32
    %c0_i32_1 = arith.constant 0 : i32
    return %c0_i32, %c0_i32_0 : i32, i32
  }
  func.func @transform_3(%arg0: i32) -> (i32, i32) {
    %c0_i32 = arith.constant 0 : i32
    %c0_i32_0 = arith.constant 0 : i32
    %c0_i32_1 = arith.constant 0 : i32
    return %c0_i32, %c0_i32_0 : i32, i32
  }
  func.func @transform_4(%arg0: i32) -> (i32, i32) {
    %c0_i32 = arith.constant 0 : i32
    %c0_i32_0 = arith.constant 0 : i32
    %c0_i32_1 = arith.constant 0 : i32
    return %c0_i32, %c0_i32_0 : i32, i32
  }
  func.func @transform_5(%arg0: i32) -> (i32, i32) {
    %c0_i32 = arith.constant 0 : i32
    %c0_i32_0 = arith.constant 0 : i32
    %c0_i32_1 = arith.constant 0 : i32
    return %c0_i32, %c0_i32_0 : i32, i32
  }
  func.func @transform_6(%arg0: i32) -> (i32, i32) {
    %c0_i32 = arith.constant 0 : i32
    %c0_i32_0 = arith.constant 0 : i32
    %c0_i32_1 = arith.constant 0 : i32
    return %c0_i32, %c0_i32_0 : i32, i32
  }
  func.func @transform_7(%arg0: i32) -> (i32, i32) {
    %c0_i32 = arith.constant 0 : i32
    %c0_i32_0 = arith.constant 0 : i32
    %c0_i32_1 = arith.constant 0 : i32
    return %c0_i32, %c0_i32_0 : i32, i32
  }
  func.func @transform_8(%arg0: i32) -> (i32, i32) {
    %c0_i32 = arith.constant 0 : i32
    %c0_i32_0 = arith.constant 0 : i32
    %c0_i32_1 = arith.constant 0 : i32
    return %c0_i32, %c0_i32_0 : i32, i32
  }
  func.func @transform_9(%arg0: i32) -> (i32, i32) {
    %c0_i32 = arith.constant 0 : i32
    %c0_i32_0 = arith.constant 0 : i32
    %c0_i32_1 = arith.constant 0 : i32
    return %c0_i32, %c0_i32_0 : i32, i32
  }
  func.func @transform_10(%arg0: i32) -> (i32, i32) {
    %c0_i32 = arith.constant 0 : i32
    %c0_i32_0 = arith.constant 0 : i32
    %c0_i32_1 = arith.constant 0 : i32
    return %c0_i32, %c0_i32_0 : i32, i32
  }
  func.func @transform_11(%arg0: i32) -> (i32, i32) {
    %c0_i32 = arith.constant 0 : i32
    %c0_i32_0 = arith.constant 0 : i32
    %c0_i32_1 = arith.constant 0 : i32
    return %c0_i32, %c0_i32_0 : i32, i32
  }
  func.func @transform_12(%arg0: i32) -> (i32, i32) {
    %c0_i32 = arith.constant 0 : i32
    %c0_i32_0 = arith.constant 0 : i32
    %c0_i32_1 = arith.constant 0 : i32
    return %c0_i32, %c0_i32_0 : i32, i32
  }
  func.func @transform_13(%arg0: i32) -> (i32, i32) {
    %c0_i32 = arith.constant 0 : i32
    %c0_i32_0 = arith.constant 0 : i32
    %c0_i32_1 = arith.constant 0 : i32
    return %c0_i32, %c0_i32_0 : i32, i32
  }
  func.func @transform_14(%arg0: i32) -> (i32, i32) {
    %c0_i32 = arith.constant 0 : i32
    %c0_i32_0 = arith.constant 0 : i32
    return %arg0, %c0_i32 : i32, i32
  }
  func.func @transform_15(%arg0: i32) -> (i32, i32) {
    %c0_i32 = arith.constant 0 : i32
    %c0_i32_0 = arith.constant 0 : i32
    return %arg0, %c0_i32 : i32, i32
  }
}

</mosaic_0001>

<llo_original>
// kernel: vae_forward.1
$region0: #{vae_forward.1}
  #allocation0 [shape = 'u32[]', space=smem, size = 0x4, offset = 0x4, fixed_abs, tag = 'smem constant byte address 0x4 - core index']
  #allocation1 [shape = 'u32[144,128]{1,0:T(1,128)}', space=vmem, size = 0x12000, scoped, tag = 'internal scratch']
  %s0 = inlined_call_operand.vmem [shape: f32[8,784], index: 0, kind: input, shape index: {}]
  %s1 = inlined_call_operand.vmem [shape: f32[8,32], index: 1, kind: input, shape index: {}]
  %s2 = inlined_call_operand.vmem [shape: bf16[784,256], index: 2, kind: input, shape index: {}]
  %s3 = inlined_call_operand.vmem [shape: f32[1,256], index: 3, kind: input, shape index: {}]
  %s4 = inlined_call_operand.vmem [shape: bf16[256,128], index: 4, kind: input, shape index: {}]
  %s5 = inlined_call_operand.vmem [shape: f32[1,128], index: 5, kind: input, shape index: {}]
  %s6 = inlined_call_operand.vmem [shape: bf16[128,128], index: 6, kind: input, shape index: {}]
  %s7 = inlined_call_operand.vmem [shape: f32[1,128], index: 7, kind: input, shape index: {}]
  %s8 = inlined_call_operand.vmem [shape: bf16[32,128], index: 8, kind: input, shape index: {}]
  %s9 = inlined_call_operand.vmem [shape: f32[1,128], index: 9, kind: input, shape index: {}]
  %s10 = inlined_call_operand.vmem [shape: bf16[128,256], index: 10, kind: input, shape index: {}]
  %s11 = inlined_call_operand.vmem [shape: f32[1,256], index: 11, kind: input, shape index: {}]
  %s12 = inlined_call_operand.vmem [shape: bf16[256,784], index: 12, kind: input, shape index: {}]
  %s13 = inlined_call_operand.vmem [shape: f32[1,784], index: 13, kind: input, shape index: {}]
  %s14 = inlined_call_operand.hbm [shape: f32[8,784], index: 14, kind: output, shape index: {0}]
  %s15 = inlined_call_operand.vmem [shape: f32[8,128], index: 15, kind: output, shape index: {1}]
  %16 = xla_tuple %s14, %s15
  %s17 = sld [smem:[#allocation0]]
  $region74: #{vae_forward.1} parent=0
    _
  %s19 = ssub.s32 1, %s17
  %s20 = scalar_select 0, %s19, %s17
  $region1: #{vae_forward.1} parent=0
    #allocation2 [shape = 'u8[28672]{0}', space=vmem, size = 0x7000, scoped, tag = 'output window, operand 0, single buffered']
    #allocation3 [shape = 's32[1]{0}', space=sflag, size = 0x4, scoped, tag = 'scoped memory for vae_forward.1']
    %21 = vsyncpa [#allocation3], 0
    // Predicated region
    $region2: #{vae_forward.1} parent=1 // pred_check
      _
    $region3: #{vae_forward.1} parent=1 // pred_check_branch
      %23 = sbr.rel (0) target = $region5
    $region4: #{vae_forward.1} parent=1 // pred_region
      _
    $region5: #{vae_forward.1} parent=1 // pred_fallthru
      _
    // Predicated region
    $region6: #{vae_forward.1} parent=1 // pred_check
      _
    $region7: #{vae_forward.1} parent=1 // pred_check_branch
      %25 = sbr.rel (0) target = $region9
    $region8: #{vae_forward.1} parent=1 // pred_region
      _
    $region9: #{vae_forward.1} parent=1 // pred_fallthru
      _
    // Predicated region
    $region10: #{vae_forward.1} parent=1 // pred_check
      _
    $region11: #{vae_forward.1} parent=1 // pred_check_branch
      %27 = sbr.rel (0) target = $region13
    $region12: #{vae_forward.1} parent=1 // pred_region
      _
    $region13: #{vae_forward.1} parent=1 // pred_fallthru
      _
    // Predicated region
    $region14: #{vae_forward.1} parent=1 // pred_check
      _
    $region15: #{vae_forward.1} parent=1 // pred_check_branch
      %29 = sbr.rel (0) target = $region17
    $region16: #{vae_forward.1} parent=1 // pred_region
      _
    $region17: #{vae_forward.1} parent=1 // pred_fallthru
      _
    // Predicated region
    $region18: #{vae_forward.1} parent=1 // pred_check
      _
    $region19: #{vae_forward.1} parent=1 // pred_check_branch
      %31 = sbr.rel (0) target = $region21
    $region20: #{vae_forward.1} parent=1 // pred_region
      _
    $region21: #{vae_forward.1} parent=1 // pred_fallthru
      _
    // Predicated region
    $region22: #{vae_forward.1} parent=1 // pred_check
      _
    $region23: #{vae_forward.1} parent=1 // pred_check_branch
      %33 = sbr.rel (0) target = $region25
    $region24: #{vae_forward.1} parent=1 // pred_region
      _
    $region25: #{vae_forward.1} parent=1 // pred_fallthru
      _
    // Predicated region
    $region26: #{vae_forward.1} parent=1 // pred_check
      _
    $region27: #{vae_forward.1} parent=1 // pred_check_branch
      %35 = sbr.rel (0) target = $region29
    $region28: #{vae_forward.1} parent=1 // pred_region
      _
    $region29: #{vae_forward.1} parent=1 // pred_fallthru
      _
    // Predicated region
    $region30: #{vae_forward.1} parent=1 // pred_check
      _
    $region31: #{vae_forward.1} parent=1 // pred_check_branch
      %37 = sbr.rel (0) target = $region33
    $region32: #{vae_forward.1} parent=1 // pred_region
      _
    $region33: #{vae_forward.1} parent=1 // pred_fallthru
      _
    // Predicated region
    $region34: #{vae_forward.1} parent=1 // pred_check
      _
    $region35: #{vae_forward.1} parent=1 // pred_check_branch
      %39 = sbr.rel (0) target = $region37
    $region36: #{vae_forward.1} parent=1 // pred_region
      _
    $region37: #{vae_forward.1} parent=1 // pred_fallthru
      _
    // Predicated region
    $region38: #{vae_forward.1} parent=1 // pred_check
      _
    $region39: #{vae_forward.1} parent=1 // pred_check_branch
      %41 = sbr.rel (0) target = $region41
    $region40: #{vae_forward.1} parent=1 // pred_region
      _
    $region41: #{vae_forward.1} parent=1 // pred_fallthru
      _
    // Predicated region
    $region42: #{vae_forward.1} parent=1 // pred_check
      _
    $region43: #{vae_forward.1} parent=1 // pred_check_branch
      %43 = sbr.rel (0) target = $region45
    $region44: #{vae_forward.1} parent=1 // pred_region
      _
    $region45: #{vae_forward.1} parent=1 // pred_fallthru
      _
    // Predicated region
    $region46: #{vae_forward.1} parent=1 // pred_check
      _
    $region47: #{vae_forward.1} parent=1 // pred_check_branch
      %45 = sbr.rel (0) target = $region49
    $region48: #{vae_forward.1} parent=1 // pred_region
      _
    $region49: #{vae_forward.1} parent=1 // pred_fallthru
      _
    // Predicated region
    $region50: #{vae_forward.1} parent=1 // pred_check
      _
    $region51: #{vae_forward.1} parent=1 // pred_check_branch
      %47 = sbr.rel (0) target = $region53
    $region52: #{vae_forward.1} parent=1 // pred_region
      _
    $region53: #{vae_forward.1} parent=1 // pred_fallthru
      _
    // Predicated region
    $region54: #{vae_forward.1} parent=1 // pred_check
      _
    $region55: #{vae_forward.1} parent=1 // pred_check_branch
      %49 = sbr.rel (0) target = $region57
    $region56: #{vae_forward.1} parent=1 // pred_region
      _
    $region57: #{vae_forward.1} parent=1 // pred_fallthru
      _
    %v51 = vld [vmem:[%s0] sm:$0xff]
    %v52 = vld [vmem:[%s0 + $0x8] sm:$0xff]
    %v53 = vld [vmem:[%s0 + $0x10] sm:$0xff]
    %v54 = vld [vmem:[%s0 + $0x18] sm:$0xff]
    %v55 = vld [vmem:[%s0 + $0x20] sm:$0xff]
    %v56 = vld [vmem:[%s0 + $0x28] sm:$0xff]
    %v57 = vld [vmem:[%s0 + $0x30] sm:$0xff]
    %v58 = vpack.c.bf16 %v51, %v51
    %v59 = vpack.c.bf16 %v52, %v52
    %v60 = vpack.c.bf16 %v53, %v53
    %v61 = vpack.c.bf16 %v54, %v54
    %v62 = vpack.c.bf16 %v55, %v55
    %v63 = vpack.c.bf16 %v56, %v56
    %v64 = vpack.c.bf16 %v57, %v57
    %v65 = vld [vmem:[%s2] sm:$0xff]
    %v66 = vld [vmem:[%s2 + $0x8] sm:$0xff]
    %v67 = vld [vmem:[%s2 + $0x10] sm:$0xff]
    %v68 = vld [vmem:[%s2 + $0x18] sm:$0xff]
    %v69 = vld [vmem:[%s2 + $0x20] sm:$0xff]
    %v70 = vld [vmem:[%s2 + $0x28] sm:$0xff]
    %v71 = vld [vmem:[%s2 + $0x30] sm:$0xff]
    %v72 = vld [vmem:[%s2 + $0x38] sm:$0xff]
    %v73 = vld [vmem:[%s2 + $0x40] sm:$0xff]
    %v74 = vld [vmem:[%s2 + $0x48] sm:$0xff]
    %v75 = vld [vmem:[%s2 + $0x50] sm:$0xff]
    %v76 = vld [vmem:[%s2 + $0x58] sm:$0xff]
    %v77 = vld [vmem:[%s2 + $0x60] sm:$0xff]
    %v78 = vld [vmem:[%s2 + $0x68] sm:$0xff]
    %v79 = vld [vmem:[%s2 + $0x70] sm:$0xff]
    %v80 = vld [vmem:[%s2 + $0x78] sm:$0xff]
    %v81 = vld [vmem:[%s2 + $0x80] sm:$0xff]
    %v82 = vld [vmem:[%s2 + $0x88] sm:$0xff]
    %v83 = vld [vmem:[%s2 + $0x90] sm:$0xff]
    %v84 = vld [vmem:[%s2 + $0x98] sm:$0xff]
    %v85 = vld [vmem:[%s2 + $0xa0] sm:$0xff]
    %v86 = vld [vmem:[%s2 + $0xa8] sm:$0xff]
    %v87 = vld [vmem:[%s2 + $0xb0] sm:$0xff]
    %v88 = vld [vmem:[%s2 + $0xb8] sm:$0xff]
    %v89 = vld [vmem:[%s2 + $0xc0] sm:$0xff]
    %v90 = vld [vmem:[%s2 + $0xc8] sm:$0xff]
    %v91 = vld [vmem:[%s2 + $0xd0] sm:$0xff]
    %v92 = vld [vmem:[%s2 + $0xd8] sm:$0xff]
    %v93 = vld [vmem:[%s2 + $0xe0] sm:$0xff]
    %v94 = vld [vmem:[%s2 + $0xe8] sm:$0xff]
    %v95 = vld [vmem:[%s2 + $0xf0] sm:$0xff]
    %v96 = vld [vmem:[%s2 + $0xf8] sm:$0xff]
    %v97 = vld [vmem:[%s2 + $0x100] sm:$0xff]
    %v98 = vld [vmem:[%s2 + $0x108] sm:$0xff]
    %v99 = vld [vmem:[%s2 + $0x110] sm:$0xff]
    %v100 = vld [vmem:[%s2 + $0x118] sm:$0xff]
    %v101 = vld [vmem:[%s2 + $0x120] sm:$0xff]
    %v102 = vld [vmem:[%s2 + $0x128] sm:$0xff]
    %v103 = vld [vmem:[%s2 + $0x130] sm:$0xff]
    %v104 = vld [vmem:[%s2 + $0x138] sm:$0xff]
    %v105 = vld [vmem:[%s2 + $0x140] sm:$0xff]
    %v106 = vld [vmem:[%s2 + $0x148] sm:$0xff]
    %v107 = vld [vmem:[%s2 + $0x150] sm:$0xff]
    %v108 = vld [vmem:[%s2 + $0x158] sm:$0xff]
    %v109 = vld [vmem:[%s2 + $0x160] sm:$0xff]
    %v110 = vld [vmem:[%s2 + $0x168] sm:$0xff]
    %v111 = vld [vmem:[%s2 + $0x170] sm:$0xff]
    %v112 = vld [vmem:[%s2 + $0x178] sm:$0xff]
    %v113 = vld [vmem:[%s2 + $0x180] sm:$0xff]
    %v114 = vld [vmem:[%s2 + $0x188] sm:$0xff]
    %v115 = vld [vmem:[%s2 + $0x190] sm:$0xff]
    %v116 = vld [vmem:[%s2 + $0x198] sm:$0xff]
    %v117 = vld [vmem:[%s2 + $0x1a0] sm:$0xff]
    %v118 = vld [vmem:[%s2 + $0x1a8] sm:$0xff]
    %v119 = vld [vmem:[%s2 + $0x1b0] sm:$0xff]
    %v120 = vld [vmem:[%s2 + $0x1b8] sm:$0xff]
    %v121 = vld [vmem:[%s2 + $0x1c0] sm:$0xff]
    %v122 = vld [vmem:[%s2 + $0x1c8] sm:$0xff]
    %v123 = vld [vmem:[%s2 + $0x1d0] sm:$0xff]
    %v124 = vld [vmem:[%s2 + $0x1d8] sm:$0xff]
    %v125 = vld [vmem:[%s2 + $0x1e0] sm:$0xff]
    %v126 = vld [vmem:[%s2 + $0x1e8] sm:$0xff]
    %v127 = vld [vmem:[%s2 + $0x1f0] sm:$0xff]
    %v128 = vld [vmem:[%s2 + $0x1f8] sm:$0xff]
    %v129 = vld [vmem:[%s2 + $0x200] sm:$0xff]
    %v130 = vld [vmem:[%s2 + $0x208] sm:$0xff]
    %v131 = vld [vmem:[%s2 + $0x210] sm:$0xff]
    %v132 = vld [vmem:[%s2 + $0x218] sm:$0xff]
    %v133 = vld [vmem:[%s2 + $0x220] sm:$0xff]
    %v134 = vld [vmem:[%s2 + $0x228] sm:$0xff]
    %v135 = vld [vmem:[%s2 + $0x230] sm:$0xff]
    %v136 = vld [vmem:[%s2 + $0x238] sm:$0xff]
    %v137 = vld [vmem:[%s2 + $0x240] sm:$0xff]
    %v138 = vld [vmem:[%s2 + $0x248] sm:$0xff]
    %v139 = vld [vmem:[%s2 + $0x250] sm:$0xff]
    %v140 = vld [vmem:[%s2 + $0x258] sm:$0xff]
    %v141 = vld [vmem:[%s2 + $0x260] sm:$0xff]
    %v142 = vld [vmem:[%s2 + $0x268] sm:$0xff]
    %v143 = vld [vmem:[%s2 + $0x270] sm:$0xff]
    %v144 = vld [vmem:[%s2 + $0x278] sm:$0xff]
    %v145 = vld [vmem:[%s2 + $0x280] sm:$0xff]
    %v146 = vld [vmem:[%s2 + $0x288] sm:$0xff]
    %v147 = vld [vmem:[%s2 + $0x290] sm:$0xff]
    %v148 = vld [vmem:[%s2 + $0x298] sm:$0xff]
    %v149 = vld [vmem:[%s2 + $0x2a0] sm:$0xff]
    %v150 = vld [vmem:[%s2 + $0x2a8] sm:$0xff]
    %v151 = vld [vmem:[%s2 + $0x2b0] sm:$0xff]
    %v152 = vld [vmem:[%s2 + $0x2b8] sm:$0xff]
    %v153 = vld [vmem:[%s2 + $0x2c0] sm:$0xff]
    %v154 = vld [vmem:[%s2 + $0x2c8] sm:$0xff]
    %v155 = vld [vmem:[%s2 + $0x2d0] sm:$0xff]
    %v156 = vld [vmem:[%s2 + $0x2d8] sm:$0xff]
    %v157 = vld [vmem:[%s2 + $0x2e0] sm:$0xff]
    %v158 = vld [vmem:[%s2 + $0x2e8] sm:$0xff]
    %v159 = vld [vmem:[%s2 + $0x2f0] sm:$0xff]
    %v160 = vld [vmem:[%s2 + $0x2f8] sm:$0xff]
    %v161 = vld [vmem:[%s2 + $0x300] sm:$0xff]
    %v162 = vld [vmem:[%s2 + $0x308] sm:$0xff]
    %v163 = vld [vmem:[%s3] sm:$0x3]
    %v165 = vlaneseq
    %v166 = vshrl.u32 %v165, 7
    %v167 = vsub.s32 0, %v166
    %v168 = vrot.slane %v163, %v167
    %v169 = vlaneseq
    %v170 = vshrl.u32 %v169, 7
    %v171 = vsub.s32 1, %v170
    %v172 = vrot.slane %v163, %v171
    %v273 = vunpack.c.l.b16 %v65
    %v274 = vunpack.c.h.b16 %v65
    %v275 = vunpack.c.l.b16 %v66
    %v276 = vunpack.c.h.b16 %v66
    %v277 = vunpack.c.l.b16 %v67
    %v278 = vunpack.c.h.b16 %v67
    %v279 = vunpack.c.l.b16 %v68
    %v280 = vunpack.c.h.b16 %v68
    %v281 = vunpack.c.l.b16 %v69
    %v282 = vunpack.c.h.b16 %v69
    %v283 = vunpack.c.l.b16 %v70
    %v284 = vunpack.c.h.b16 %v70
    %v285 = vunpack.c.l.b16 %v71
    %v286 = vunpack.c.h.b16 %v71
    %v287 = vunpack.c.l.b16 %v72
    %v288 = vunpack.c.h.b16 %v72
    %v289 = vunpack.c.l.b16 %v73
    %v290 = vunpack.c.h.b16 %v73
    %v291 = vunpack.c.l.b16 %v74
    %v292 = vunpack.c.h.b16 %v74
    %v293 = vunpack.c.l.b16 %v75
    %v294 = vunpack.c.h.b16 %v75
    %v295 = vunpack.c.l.b16 %v76
    %v296 = vunpack.c.h.b16 %v76
    %v297 = vunpack.c.l.b16 %v77
    %v298 = vunpack.c.h.b16 %v77
    %v299 = vunpack.c.l.b16 %v78
    %v300 = vunpack.c.h.b16 %v78
    %v301 = vunpack.c.l.b16 %v79
    %v302 = vunpack.c.h.b16 %v79
    %v303 = vunpack.c.l.b16 %v80
    %v304 = vunpack.c.h.b16 %v80
    %v305 = vunpack.c.l.b16 %v81
    %v306 = vunpack.c.h.b16 %v81
    %v307 = vunpack.c.l.b16 %v82
    %v308 = vunpack.c.h.b16 %v82
    %v309 = vunpack.c.l.b16 %v83
    %v310 = vunpack.c.h.b16 %v83
    %v311 = vunpack.c.l.b16 %v84
    %v312 = vunpack.c.h.b16 %v84
    %v313 = vunpack.c.l.b16 %v85
    %v314 = vunpack.c.h.b16 %v85
    %v315 = vunpack.c.l.b16 %v86
    %v316 = vunpack.c.h.b16 %v86
    %v317 = vunpack.c.l.b16 %v87
    %v318 = vunpack.c.h.b16 %v87
    %v319 = vunpack.c.l.b16 %v88
    %v320 = vunpack.c.h.b16 %v88
    %v321 = vunpack.c.l.b16 %v89
    %v322 = vunpack.c.h.b16 %v89
    %v323 = vunpack.c.l.b16 %v90
    %v324 = vunpack.c.h.b16 %v90
    %v325 = vunpack.c.l.b16 %v91
    %v326 = vunpack.c.h.b16 %v91
    %v327 = vunpack.c.l.b16 %v92
    %v328 = vunpack.c.h.b16 %v92
    %v329 = vunpack.c.l.b16 %v93
    %v330 = vunpack.c.h.b16 %v93
    %v331 = vunpack.c.l.b16 %v94
    %v332 = vunpack.c.h.b16 %v94
    %v333 = vunpack.c.l.b16 %v95
    %v334 = vunpack.c.h.b16 %v95
    %v335 = vunpack.c.l.b16 %v96
    %v336 = vunpack.c.h.b16 %v96
    %v337 = vunpack.c.l.b16 %v97
    %v338 = vunpack.c.h.b16 %v97
    %v339 = vunpack.c.l.b16 %v98
    %v340 = vunpack.c.h.b16 %v98
    %v341 = vunpack.c.l.b16 %v99
    %v342 = vunpack.c.h.b16 %v99
    %v343 = vunpack.c.l.b16 %v100
    %v344 = vunpack.c.h.b16 %v100
    %v345 = vunpack.c.l.b16 %v101
    %v346 = vunpack.c.h.b16 %v101
    %v347 = vunpack.c.l.b16 %v102
    %v348 = vunpack.c.h.b16 %v102
    %v349 = vunpack.c.l.b16 %v103
    %v350 = vunpack.c.h.b16 %v103
    %v351 = vunpack.c.l.b16 %v104
    %v352 = vunpack.c.h.b16 %v104
    %v353 = vunpack.c.l.b16 %v105
    %v354 = vunpack.c.h.b16 %v105
    %v355 = vunpack.c.l.b16 %v106
    %v356 = vunpack.c.h.b16 %v106
    %v357 = vunpack.c.l.b16 %v107
    %v358 = vunpack.c.h.b16 %v107
    %v359 = vunpack.c.l.b16 %v108
    %v360 = vunpack.c.h.b16 %v108
    %v361 = vunpack.c.l.b16 %v109
    %v362 = vunpack.c.h.b16 %v109
    %v363 = vunpack.c.l.b16 %v110
    %v364 = vunpack.c.h.b16 %v110
    %v365 = vunpack.c.l.b16 %v111
    %v366 = vunpack.c.h.b16 %v111
    %v367 = vunpack.c.l.b16 %v112
    %v368 = vunpack.c.h.b16 %v112
    %v369 = vunpack.c.l.b16 %v113
    %v370 = vunpack.c.h.b16 %v113
    %v371 = vunpack.c.l.b16 %v114
    %v372 = vunpack.c.h.b16 %v114
    %v373 = vunpack.c.l.b16 %v115
    %v374 = vunpack.c.h.b16 %v115
    %v375 = vunpack.c.l.b16 %v116
    %v376 = vunpack.c.h.b16 %v116
    %v377 = vunpack.c.l.b16 %v117
    %v378 = vunpack.c.h.b16 %v117
    %v379 = vunpack.c.l.b16 %v118
    %v380 = vunpack.c.h.b16 %v118
    %v381 = vunpack.c.l.b16 %v119
    %v382 = vunpack.c.h.b16 %v119
    %v383 = vunpack.c.l.b16 %v120
    %v384 = vunpack.c.h.b16 %v120
    %v385 = vunpack.c.l.b16 %v121
    %v386 = vunpack.c.h.b16 %v121
    %v387 = vunpack.c.l.b16 %v122
    %v388 = vunpack.c.h.b16 %v122
    %v389 = vunpack.c.l.b16 %v123
    %v390 = vunpack.c.h.b16 %v123
    %v391 = vunpack.c.l.b16 %v124
    %v392 = vunpack.c.h.b16 %v124
    %v393 = vunpack.c.l.b16 %v125
    %v394 = vunpack.c.h.b16 %v125
    %v395 = vunpack.c.l.b16 %v126
    %v396 = vunpack.c.h.b16 %v126
    %v397 = vunpack.c.l.b16 %v127
    %v398 = vunpack.c.h.b16 %v127
    %v399 = vunpack.c.l.b16 %v128
    %v400 = vunpack.c.h.b16 %v128
    %v401 = vunpack.c.l.b16 %v129
    %v402 = vunpack.c.h.b16 %v129
    %v403 = vunpack.c.l.b16 %v130
    %v404 = vunpack.c.h.b16 %v130
    %v405 = vunpack.c.l.b16 %v131
    %v406 = vunpack.c.h.b16 %v131
    %v407 = vunpack.c.l.b16 %v132
    %v408 = vunpack.c.h.b16 %v132
    %v409 = vunpack.c.l.b16 %v133
    %v410 = vunpack.c.h.b16 %v133
    %v411 = vunpack.c.l.b16 %v134
    %v412 = vunpack.c.h.b16 %v134
    %v413 = vunpack.c.l.b16 %v135
    %v414 = vunpack.c.h.b16 %v135
    %v415 = vunpack.c.l.b16 %v136
    %v416 = vunpack.c.h.b16 %v136
    %v417 = vunpack.c.l.b16 %v137
    %v418 = vunpack.c.h.b16 %v137
    %v419 = vunpack.c.l.b16 %v138
    %v420 = vunpack.c.h.b16 %v138
    %v421 = vunpack.c.l.b16 %v139
    %v422 = vunpack.c.h.b16 %v139
    %v423 = vunpack.c.l.b16 %v140
    %v424 = vunpack.c.h.b16 %v140
    %v425 = vunpack.c.l.b16 %v141
    %v426 = vunpack.c.h.b16 %v141
    %v427 = vunpack.c.l.b16 %v142
    %v428 = vunpack.c.h.b16 %v142
    %v429 = vunpack.c.l.b16 %v143
    %v430 = vunpack.c.h.b16 %v143
    %v431 = vunpack.c.l.b16 %v144
    %v432 = vunpack.c.h.b16 %v144
    %v433 = vunpack.c.l.b16 %v145
    %v434 = vunpack.c.h.b16 %v145
    %v435 = vunpack.c.l.b16 %v146
    %v436 = vunpack.c.h.b16 %v146
    %v437 = vunpack.c.l.b16 %v147
    %v438 = vunpack.c.h.b16 %v147
    %v439 = vunpack.c.l.b16 %v148
    %v440 = vunpack.c.h.b16 %v148
    %v441 = vunpack.c.l.b16 %v149
    %v442 = vunpack.c.h.b16 %v149
    %v443 = vunpack.c.l.b16 %v150
    %v444 = vunpack.c.h.b16 %v150
    %v445 = vunpack.c.l.b16 %v151
    %v446 = vunpack.c.h.b16 %v151
    %v447 = vunpack.c.l.b16 %v152
    %v448 = vunpack.c.h.b16 %v152
    %v449 = vunpack.c.l.b16 %v153
    %v450 = vunpack.c.h.b16 %v153
    %v451 = vunpack.c.l.b16 %v154
    %v452 = vunpack.c.h.b16 %v154
    %v453 = vunpack.c.l.b16 %v155
    %v454 = vunpack.c.h.b16 %v155
    %v455 = vunpack.c.l.b16 %v156
    %v456 = vunpack.c.h.b16 %v156
    %v457 = vunpack.c.l.b16 %v157
    %v458 = vunpack.c.h.b16 %v157
    %v459 = vunpack.c.l.b16 %v158
    %v460 = vunpack.c.h.b16 %v158
    %v461 = vunpack.c.l.b16 %v159
    %v462 = vunpack.c.h.b16 %v159
    %v463 = vunpack.c.l.b16 %v160
    %v464 = vunpack.c.h.b16 %v160
    %v465 = vunpack.c.l.b16 %v161
    %v466 = vunpack.c.h.b16 %v161
    %v467 = vunpack.c.l.b16 %v162
    %v468 = vunpack.c.h.b16 %v162
    %v469 = vpack.c.b16 %v275, %v273
    %v470 = vpack.c.b16 %v276, %v274
    %v471 = vpack.c.b16 %v279, %v277
    %v472 = vpack.c.b16 %v280, %v278
    %v473 = vpack.c.b16 %v283, %v281
    %v474 = vpack.c.b16 %v284, %v282
    %v475 = vpack.c.b16 %v287, %v285
    %v476 = vpack.c.b16 %v288, %v286
    %v477 = vpack.c.b16 %v291, %v289
    %v478 = vpack.c.b16 %v292, %v290
    %v479 = vpack.c.b16 %v295, %v293
    %v480 = vpack.c.b16 %v296, %v294
    %v481 = vpack.c.b16 %v299, %v297
    %v482 = vpack.c.b16 %v300, %v298
    %v483 = vpack.c.b16 %v303, %v301
    %v484 = vpack.c.b16 %v304, %v302
    %v485 = vpack.c.b16 %v307, %v305
    %v486 = vpack.c.b16 %v308, %v306
    %v487 = vpack.c.b16 %v311, %v309
    %v488 = vpack.c.b16 %v312, %v310
    %v489 = vpack.c.b16 %v315, %v313
    %v490 = vpack.c.b16 %v316, %v314
    %v491 = vpack.c.b16 %v319, %v317
    %v492 = vpack.c.b16 %v320, %v318
    %v493 = vpack.c.b16 %v323, %v321
    %v494 = vpack.c.b16 %v324, %v322
    %v495 = vpack.c.b16 %v327, %v325
    %v496 = vpack.c.b16 %v328, %v326
    %v497 = vpack.c.b16 %v331, %v329
    %v498 = vpack.c.b16 %v332, %v330
    %v499 = vpack.c.b16 %v335, %v333
    %v500 = vpack.c.b16 %v336, %v334
    %v501 = vpack.c.b16 %v339, %v337
    %v502 = vpack.c.b16 %v340, %v338
    %v503 = vpack.c.b16 %v343, %v341
    %v504 = vpack.c.b16 %v344, %v342
    %v505 = vpack.c.b16 %v347, %v345
    %v506 = vpack.c.b16 %v348, %v346
    %v507 = vpack.c.b16 %v351, %v349
    %v508 = vpack.c.b16 %v352, %v350
    %v509 = vpack.c.b16 %v355, %v353
    %v510 = vpack.c.b16 %v356, %v354
    %v511 = vpack.c.b16 %v359, %v357
    %v512 = vpack.c.b16 %v360, %v358
    %v513 = vpack.c.b16 %v363, %v361
    %v514 = vpack.c.b16 %v364, %v362
    %v515 = vpack.c.b16 %v367, %v365
    %v516 = vpack.c.b16 %v368, %v366
    %v517 = vpack.c.b16 %v371, %v369
    %v518 = vpack.c.b16 %v372, %v370
    %v519 = vpack.c.b16 %v375, %v373
    %v520 = vpack.c.b16 %v376, %v374
    %v521 = vpack.c.b16 %v379, %v377
    %v522 = vpack.c.b16 %v380, %v378
    %v523 = vpack.c.b16 %v383, %v381
    %v524 = vpack.c.b16 %v384, %v382
    %v525 = vpack.c.b16 %v387, %v385
    %v526 = vpack.c.b16 %v388, %v386
    %v527 = vpack.c.b16 %v391, %v389
    %v528 = vpack.c.b16 %v392, %v390
    %v529 = vpack.c.b16 %v395, %v393
    %v530 = vpack.c.b16 %v396, %v394
    %v531 = vpack.c.b16 %v399, %v397
    %v532 = vpack.c.b16 %v400, %v398
    %v533 = vpack.c.b16 %v403, %v401
    %v534 = vpack.c.b16 %v404, %v402
    %v535 = vpack.c.b16 %v407, %v405
    %v536 = vpack.c.b16 %v408, %v406
    %v537 = vpack.c.b16 %v411, %v409
    %v538 = vpack.c.b16 %v412, %v410
    %v539 = vpack.c.b16 %v415, %v413
    %v540 = vpack.c.b16 %v416, %v414
    %v541 = vpack.c.b16 %v419, %v417
    %v542 = vpack.c.b16 %v420, %v418
    %v543 = vpack.c.b16 %v423, %v421
    %v544 = vpack.c.b16 %v424, %v422
    %v545 = vpack.c.b16 %v427, %v425
    %v546 = vpack.c.b16 %v428, %v426
    %v547 = vpack.c.b16 %v431, %v429
    %v548 = vpack.c.b16 %v432, %v430
    %v549 = vpack.c.b16 %v435, %v433
    %v550 = vpack.c.b16 %v436, %v434
    %v551 = vpack.c.b16 %v439, %v437
    %v552 = vpack.c.b16 %v440, %v438
    %v553 = vpack.c.b16 %v443, %v441
    %v554 = vpack.c.b16 %v444, %v442
    %v555 = vpack.c.b16 %v447, %v445
    %v556 = vpack.c.b16 %v448, %v446
    %v557 = vpack.c.b16 %v451, %v449
    %v558 = vpack.c.b16 %v452, %v450
    %v559 = vpack.c.b16 %v455, %v453
    %v560 = vpack.c.b16 %v456, %v454
    %v561 = vpack.c.b16 %v459, %v457
    %v562 = vpack.c.b16 %v460, %v458
    %v563 = vpack.c.b16 %v463, %v461
    %v564 = vpack.c.b16 %v464, %v462
    %v565 = vpack.c.b16 %v467, %v465
    %v566 = vpack.c.b16 %v468, %v466
    %vm665 = vcmask 130048
    %v667 = vsel %vm665, %v64, 0
    %669 = vmatprep.subr.bf16.mxu0 %v470
    %670 = vmatpush1.bf16.msra.mxu0 %v469
    %671 = vmatprep.subr.bf16.mxu0 %v472
    %672 = vmatpush1.bf16.msra.mxu0 %v471
    %673 = vmatprep.subr.bf16.mxu0 %v474
    %674 = vmatpush1.bf16.msra.mxu0 %v473
    %675 = vmatprep.subr.bf16.mxu0 %v476
    %676 = vmatpush1.bf16.msra.mxu0 %v475
    %677 = vmatprep.subr.bf16.mxu0 %v478
    %678 = vmatpush1.bf16.msra.mxu0 %v477
    %679 = vmatprep.subr.bf16.mxu0 %v480
    %680 = vmatpush1.bf16.msra.mxu0 %v479
    %681 = vmatprep.subr.bf16.mxu0 %v482
    %682 = vmatpush1.bf16.msra.mxu0 %v481
    %683 = vmatprep.subr.bf16.mxu0 %v484
    %684 = vmatpush1.bf16.msra.mxu0 %v483
    %685 = vmatprep.subr.bf16.mxu0 %v486
    %686 = vmatpush1.bf16.msra.mxu0 %v485
    %687 = vmatprep.subr.bf16.mxu0 %v488
    %688 = vmatpush1.bf16.msra.mxu0 %v487
    %689 = vmatprep.subr.bf16.mxu0 %v490
    %690 = vmatpush1.bf16.msra.mxu0 %v489
    %691 = vmatprep.subr.bf16.mxu0 %v492
    %692 = vmatpush1.bf16.msra.mxu0 %v491
    %693 = vmatprep.subr.bf16.mxu0 %v494
    %694 = vmatpush1.bf16.msra.mxu0 %v493
    %695 = vmatprep.subr.bf16.mxu0 %v496
    %696 = vmatpush1.bf16.msra.mxu0 %v495
    %697 = vmatprep.subr.bf16.mxu0 %v498
    %698 = vmatpush1.bf16.msra.mxu0 %v497
    %699 = vmatprep.subr.bf16.mxu0 %v500
    %700 = vmatpush1.bf16.msra.mxu0 %v499
    %701 = vmatprep.mubr.bf16.mxu0 %v59
    %702 = vmatmul.mubr.bf16.gmra.mrb[0].mxu0 %v58
    %v703 = vpop.f32.mrb[0].mxu0
    %v704 = vadd.f32 %v168, %v703
    %v705 = vpop.f32.mrb[0].mxu0
    %v706 = vadd.f32 %v172, %v705
    %v707 = vpop.f32.mrb[0].mxu0
    %v708 = vpop.f32.mrb[0].mxu0
    %709 = vdwg.mxu0
    %710 = vmatprep.subr.bf16.mxu0 %v502
    %711 = vmatpush1.bf16.msra.mxu0 %v501
    %712 = vmatprep.subr.bf16.mxu0 %v504
    %713 = vmatpush1.bf16.msra.mxu0 %v503
    %714 = vmatprep.subr.bf16.mxu0 %v506
    %715 = vmatpush1.bf16.msra.mxu0 %v505
    %716 = vmatprep.subr.bf16.mxu0 %v508
    %717 = vmatpush1.bf16.msra.mxu0 %v507
    %718 = vmatprep.subr.bf16.mxu0 %v510
    %719 = vmatpush1.bf16.msra.mxu0 %v509
    %720 = vmatprep.subr.bf16.mxu0 %v512
    %721 = vmatpush1.bf16.msra.mxu0 %v511
    %722 = vmatprep.subr.bf16.mxu0 %v514
    %723 = vmatpush1.bf16.msra.mxu0 %v513
    %724 = vmatprep.subr.bf16.mxu0 %v516
    %725 = vmatpush1.bf16.msra.mxu0 %v515
    %726 = vmatprep.subr.bf16.mxu0 %v518
    %727 = vmatpush1.bf16.msra.mxu0 %v517
    %728 = vmatprep.subr.bf16.mxu0 %v520
    %729 = vmatpush1.bf16.msra.mxu0 %v519
    %730 = vmatprep.subr.bf16.mxu0 %v522
    %731 = vmatpush1.bf16.msra.mxu0 %v521
    %732 = vmatprep.subr.bf16.mxu0 %v524
    %733 = vmatpush1.bf16.msra.mxu0 %v523
    %734 = vmatprep.subr.bf16.mxu0 %v526
    %735 = vmatpush1.bf16.msra.mxu0 %v525
    %736 = vmatprep.subr.bf16.mxu0 %v528
    %737 = vmatpush1.bf16.msra.mxu0 %v527
    %738 = vmatprep.subr.bf16.mxu0 %v530
    %739 = vmatpush1.bf16.msra.mxu0 %v529
    %740 = vmatprep.subr.bf16.mxu0 %v532
    %741 = vmatpush1.bf16.msra.mxu0 %v531
    %742 = vmatprep.mubr.bf16.mxu0 %v61
    %743 = vmatmul.mubr.bf16.gmra.mrb[0].mxu0 %v60
    %v744 = vpop.f32.mrb[0].mxu0
    %v745 = vadd.f32 %v704, %v744
    %v746 = vpop.f32.mrb[0].mxu0
    %v747 = vadd.f32 %v706, %v746
    %v748 = vpop.f32.mrb[0].mxu0
    %v749 = vpop.f32.mrb[0].mxu0
    %750 = vdwg.mxu0
    %751 = vmatprep.subr.bf16.mxu0 %v534
    %752 = vmatpush1.bf16.msra.mxu0 %v533
    %753 = vmatprep.subr.bf16.mxu0 %v536
    %754 = vmatpush1.bf16.msra.mxu0 %v535
    %755 = vmatprep.subr.bf16.mxu0 %v538
    %756 = vmatpush1.bf16.msra.mxu0 %v537
    %757 = vmatprep.subr.bf16.mxu0 %v540
    %758 = vmatpush1.bf16.msra.mxu0 %v539
    %759 = vmatprep.subr.bf16.mxu0 %v542
    %760 = vmatpush1.bf16.msra.mxu0 %v541
    %761 = vmatprep.subr.bf16.mxu0 %v544
    %762 = vmatpush1.bf16.msra.mxu0 %v543
    %763 = vmatprep.subr.bf16.mxu0 %v546
    %764 = vmatpush1.bf16.msra.mxu0 %v545
    %765 = vmatprep.subr.bf16.mxu0 %v548
    %766 = vmatpush1.bf16.msra.mxu0 %v547
    %767 = vmatprep.subr.bf16.mxu0 %v550
    %768 = vmatpush1.bf16.msra.mxu0 %v549
    %769 = vmatprep.subr.bf16.mxu0 %v552
    %770 = vmatpush1.bf16.msra.mxu0 %v551
    %771 = vmatprep.subr.bf16.mxu0 %v554
    %772 = vmatpush1.bf16.msra.mxu0 %v553
    %773 = vmatprep.subr.bf16.mxu0 %v556
    %774 = vmatpush1.bf16.msra.mxu0 %v555
    %775 = vmatprep.subr.bf16.mxu0 %v558
    %776 = vmatpush1.bf16.msra.mxu0 %v557
    %777 = vmatprep.subr.bf16.mxu0 %v560
    %778 = vmatpush1.bf16.msra.mxu0 %v559
    %779 = vmatprep.subr.bf16.mxu0 %v562
    %780 = vmatpush1.bf16.msra.mxu0 %v561
    %781 = vmatprep.subr.bf16.mxu0 %v564
    %782 = vmatpush1.bf16.msra.mxu0 %v563
    %783 = vmatprep.mubr.bf16.mxu0 %v63
    %784 = vmatmul.mubr.bf16.gmra.mrb[0].mxu0 %v62
    %v785 = vpop.f32.mrb[0].mxu0
    %v786 = vadd.f32 %v745, %v785
    %v787 = vpop.f32.mrb[0].mxu0
    %v788 = vadd.f32 %v747, %v787
    %v789 = vpop.f32.mrb[0].mxu0
    %v790 = vpop.f32.mrb[0].mxu0
    %791 = vdwg.mxu0
    %792 = vmatprep.subr.bf16.mxu0 %v566
    %793 = vmatpush1.bf16.msra.mxu0 %v565
    %794 = vmatprep.subr.bf16.mxu0 0
    %795 = vmatpush1.bf16.msra.mxu0 0
    %796 = vmatprep.subr.bf16.mxu0 0
    %797 = vmatpush1.bf16.msra.mxu0 0
    %798 = vmatprep.subr.bf16.mxu0 0
    %799 = vmatpush1.bf16.msra.mxu0 0
    %800 = vmatprep.subr.bf16.mxu0 0
    %801 = vmatpush1.bf16.msra.mxu0 0
    %802 = vmatprep.subr.bf16.mxu0 0
    %803 = vmatpush1.bf16.msra.mxu0 0
    %804 = vmatprep.subr.bf16.mxu0 0
    %805 = vmatpush1.bf16.msra.mxu0 0
    %806 = vmatprep.subr.bf16.mxu0 0
    %807 = vmatpush1.bf16.msra.mxu0 0
    %808 = vmatprep.subr.bf16.mxu0 0
    %809 = vmatpush1.bf16.msra.mxu0 0
    %810 = vmatprep.subr.bf16.mxu0 0
    %811 = vmatpush1.bf16.msra.mxu0 0
    %812 = vmatprep.subr.bf16.mxu0 0
    %813 = vmatpush1.bf16.msra.mxu0 0
    %814 = vmatprep.subr.bf16.mxu0 0
    %815 = vmatpush1.bf16.msra.mxu0 0
    %816 = vmatprep.subr.bf16.mxu0 0
    %817 = vmatpush1.bf16.msra.mxu0 0
    %818 = vmatprep.subr.bf16.mxu0 0
    %819 = vmatpush1.bf16.msra.mxu0 0
    %820 = vmatprep.subr.bf16.mxu0 0
    %821 = vmatpush1.bf16.msra.mxu0 0
    %822 = vmatprep.subr.bf16.mxu0 0
    %823 = vmatpush1.bf16.msra.mxu0 0
    %824 = vmatprep.mubr.bf16.mxu0 0
    %825 = vmatmul.mubr.bf16.gmra.mrb[0].mxu0 %v667
    %v826 = vpop.f32.mrb[0].mxu0
    %v827 = vadd.f32 %v786, %v826
    %v828 = vpop.f32.mrb[0].mxu0
    %v829 = vadd.f32 %v788, %v828
    %v830 = vpop.f32.mrb[0].mxu0
    %v831 = vpop.f32.mrb[0].mxu0
    %832 = vdwg.mxu0
    %v833 = vmax.f32 %v827, 0.0
    %v834 = vmax.f32 %v829, 0.0
    %v835 = vpack.c.bf16 %v833, %v833
    %v836 = vpack.c.bf16 %v834, %v834
    %v837 = vld [vmem:[%s4] sm:$0xf]
    %v838 = vld [vmem:[%s4 + $0x4] sm:$0xf]
    %v839 = vld [vmem:[%s4 + $0x8] sm:$0xf]
    %v840 = vld [vmem:[%s4 + $0xc] sm:$0xf]
    %v841 = vld [vmem:[%s4 + $0x10] sm:$0xf]
    %v842 = vld [vmem:[%s4 + $0x14] sm:$0xf]
    %v843 = vld [vmem:[%s4 + $0x18] sm:$0xf]
    %v844 = vld [vmem:[%s4 + $0x1c] sm:$0xf]
    %v845 = vld [vmem:[%s4 + $0x20] sm:$0xf]
    %v846 = vld [vmem:[%s4 + $0x24] sm:$0xf]
    %v847 = vld [vmem:[%s4 + $0x28] sm:$0xf]
    %v848 = vld [vmem:[%s4 + $0x2c] sm:$0xf]
    %v849 = vld [vmem:[%s4 + $0x30] sm:$0xf]
    %v850 = vld [vmem:[%s4 + $0x34] sm:$0xf]
    %v851 = vld [vmem:[%s4 + $0x38] sm:$0xf]
    %v852 = vld [vmem:[%s4 + $0x3c] sm:$0xf]
    %v853 = vld [vmem:[%s4 + $0x40] sm:$0xf]
    %v854 = vld [vmem:[%s4 + $0x44] sm:$0xf]
    %v855 = vld [vmem:[%s4 + $0x48] sm:$0xf]
    %v856 = vld [vmem:[%s4 + $0x4c] sm:$0xf]
    %v857 = vld [vmem:[%s4 + $0x50] sm:$0xf]
    %v858 = vld [vmem:[%s4 + $0x54] sm:$0xf]
    %v859 = vld [vmem:[%s4 + $0x58] sm:$0xf]
    %v860 = vld [vmem:[%s4 + $0x5c] sm:$0xf]
    %v861 = vld [vmem:[%s4 + $0x60] sm:$0xf]
    %v862 = vld [vmem:[%s4 + $0x64] sm:$0xf]
    %v863 = vld [vmem:[%s4 + $0x68] sm:$0xf]
    %v864 = vld [vmem:[%s4 + $0x6c] sm:$0xf]
    %v865 = vld [vmem:[%s4 + $0x70] sm:$0xf]
    %v866 = vld [vmem:[%s4 + $0x74] sm:$0xf]
    %v867 = vld [vmem:[%s4 + $0x78] sm:$0xf]
    %v868 = vld [vmem:[%s4 + $0x7c] sm:$0xf]
    %v869 = vld [vmem:[%s5] sm:$0x1]
    %v871 = vlaneseq
    %v872 = vshrl.u32 %v871, 7
    %v873 = vsub.s32 0, %v872
    %v874 = vrot.slane %v869, %v873
    %v908 = vunpack.c.l.b16 %v837
    %v909 = vunpack.c.l.b16 %v838
    %v910 = vunpack.c.l.b16 %v839
    %v911 = vunpack.c.l.b16 %v840
    %v912 = vunpack.c.l.b16 %v841
    %v913 = vunpack.c.l.b16 %v842
    %v914 = vunpack.c.l.b16 %v843
    %v915 = vunpack.c.l.b16 %v844
    %v916 = vunpack.c.l.b16 %v845
    %v917 = vunpack.c.l.b16 %v846
    %v918 = vunpack.c.l.b16 %v847
    %v919 = vunpack.c.l.b16 %v848
    %v920 = vunpack.c.l.b16 %v849
    %v921 = vunpack.c.l.b16 %v850
    %v922 = vunpack.c.l.b16 %v851
    %v923 = vunpack.c.l.b16 %v852
    %v924 = vunpack.c.l.b16 %v853
    %v925 = vunpack.c.l.b16 %v854
    %v926 = vunpack.c.l.b16 %v855
    %v927 = vunpack.c.l.b16 %v856
    %v928 = vunpack.c.l.b16 %v857
    %v929 = vunpack.c.l.b16 %v858
    %v930 = vunpack.c.l.b16 %v859
    %v931 = vunpack.c.l.b16 %v860
    %v932 = vunpack.c.l.b16 %v861
    %v933 = vunpack.c.l.b16 %v862
    %v934 = vunpack.c.l.b16 %v863
    %v935 = vunpack.c.l.b16 %v864
    %v936 = vunpack.c.l.b16 %v865
    %v937 = vunpack.c.l.b16 %v866
    %v938 = vunpack.c.l.b16 %v867
    %v939 = vunpack.c.l.b16 %v868
    %v940 = vpack.c.b16 %v909, %v908
    %v941 = vpack.c.b16 %v911, %v910
    %v942 = vpack.c.b16 %v913, %v912
    %v943 = vpack.c.b16 %v915, %v914
    %v944 = vpack.c.b16 %v917, %v916
    %v945 = vpack.c.b16 %v919, %v918
    %v946 = vpack.c.b16 %v921, %v920
    %v947 = vpack.c.b16 %v923, %v922
    %v948 = vpack.c.b16 %v925, %v924
    %v949 = vpack.c.b16 %v927, %v926
    %v950 = vpack.c.b16 %v929, %v928
    %v951 = vpack.c.b16 %v931, %v930
    %v952 = vpack.c.b16 %v933, %v932
    %v953 = vpack.c.b16 %v935, %v934
    %v954 = vpack.c.b16 %v937, %v936
    %v955 = vpack.c.b16 %v939, %v938
    %972 = vmatprep.subr.bf16.mxu0 0
    %973 = vmatpush1.bf16.msra.mxu0 %v940
    %974 = vmatprep.subr.bf16.mxu0 0
    %975 = vmatpush1.bf16.msra.mxu0 %v941
    %976 = vmatprep.subr.bf16.mxu0 0
    %977 = vmatpush1.bf16.msra.mxu0 %v942
    %978 = vmatprep.subr.bf16.mxu0 0
    %979 = vmatpush1.bf16.msra.mxu0 %v943
    %980 = vmatprep.subr.bf16.mxu0 0
    %981 = vmatpush1.bf16.msra.mxu0 %v944
    %982 = vmatprep.subr.bf16.mxu0 0
    %983 = vmatpush1.bf16.msra.mxu0 %v945
    %984 = vmatprep.subr.bf16.mxu0 0
    %985 = vmatpush1.bf16.msra.mxu0 %v946
    %986 = vmatprep.subr.bf16.mxu0 0
    %987 = vmatpush1.bf16.msra.mxu0 %v947
    %988 = vmatprep.subr.bf16.mxu0 0
    %989 = vmatpush1.bf16.msra.mxu0 %v948
    %990 = vmatprep.subr.bf16.mxu0 0
    %991 = vmatpush1.bf16.msra.mxu0 %v949
    %992 = vmatprep.subr.bf16.mxu0 0
    %993 = vmatpush1.bf16.msra.mxu0 %v950
    %994 = vmatprep.subr.bf16.mxu0 0
    %995 = vmatpush1.bf16.msra.mxu0 %v951
    %996 = vmatprep.subr.bf16.mxu0 0
    %997 = vmatpush1.bf16.msra.mxu0 %v952
    %998 = vmatprep.subr.bf16.mxu0 0
    %999 = vmatpush1.bf16.msra.mxu0 %v953
    %1000 = vmatprep.subr.bf16.mxu0 0
    %1001 = vmatpush1.bf16.msra.mxu0 %v954
    %1002 = vmatprep.subr.bf16.mxu0 0
    %1003 = vmatpush1.bf16.msra.mxu0 %v955
    %1004 = vmatprep.mubr.bf16.mxu0 %v836
    %1005 = vmatmul.mubr.bf16.gmra.mrb[0].mxu0 %v835
    %v1006 = vpop.f32.mrb[0].mxu0
    %v1007 = vadd.f32 %v874, %v1006
    %v1008 = vpop.f32.mrb[0].mxu0
    %v1009 = vpop.f32.mrb[0].mxu0
    %v1010 = vpop.f32.mrb[0].mxu0
    %1011 = vdwg.mxu0
    %v1012 = vmax.f32 %v1007, 0.0
    %v1013 = vpack.c.bf16 %v1012, %v1012
    %v1014 = vld [vmem:[%s6] sm:$0xf]
    %v1015 = vld [vmem:[%s6 + $0x4] sm:$0xf]
    %v1016 = vld [vmem:[%s6 + $0x8] sm:$0xf]
    %v1017 = vld [vmem:[%s6 + $0xc] sm:$0xf]
    %v1018 = vld [vmem:[%s6 + $0x10] sm:$0xf]
    %v1019 = vld [vmem:[%s6 + $0x14] sm:$0xf]
    %v1020 = vld [vmem:[%s6 + $0x18] sm:$0xf]
    %v1021 = vld [vmem:[%s6 + $0x1c] sm:$0xf]
    %v1022 = vld [vmem:[%s6 + $0x20] sm:$0xf]
    %v1023 = vld [vmem:[%s6 + $0x24] sm:$0xf]
    %v1024 = vld [vmem:[%s6 + $0x28] sm:$0xf]
    %v1025 = vld [vmem:[%s6 + $0x2c] sm:$0xf]
    %v1026 = vld [vmem:[%s6 + $0x30] sm:$0xf]
    %v1027 = vld [vmem:[%s6 + $0x34] sm:$0xf]
    %v1028 = vld [vmem:[%s6 + $0x38] sm:$0xf]
    %v1029 = vld [vmem:[%s6 + $0x3c] sm:$0xf]
    %v1030 = vld [vmem:[%s7] sm:$0x1]
    %v1032 = vlaneseq
    %v1033 = vshrl.u32 %v1032, 7
    %v1034 = vsub.s32 0, %v1033
    %v1035 = vrot.slane %v1030, %v1034
    %v1053 = vunpack.c.l.b16 %v1014
    %v1054 = vunpack.c.l.b16 %v1015
    %v1055 = vunpack.c.l.b16 %v1016
    %v1056 = vunpack.c.l.b16 %v1017
    %v1057 = vunpack.c.l.b16 %v1018
    %v1058 = vunpack.c.l.b16 %v1019
    %v1059 = vunpack.c.l.b16 %v1020
    %v1060 = vunpack.c.l.b16 %v1021
    %v1061 = vunpack.c.l.b16 %v1022
    %v1062 = vunpack.c.l.b16 %v1023
    %v1063 = vunpack.c.l.b16 %v1024
    %v1064 = vunpack.c.l.b16 %v1025
    %v1065 = vunpack.c.l.b16 %v1026
    %v1066 = vunpack.c.l.b16 %v1027
    %v1067 = vunpack.c.l.b16 %v1028
    %v1068 = vunpack.c.l.b16 %v1029
    %v1069 = vpack.c.b16 %v1054, %v1053
    %v1070 = vpack.c.b16 %v1056, %v1055
    %v1071 = vpack.c.b16 %v1058, %v1057
    %v1072 = vpack.c.b16 %v1060, %v1059
    %v1073 = vpack.c.b16 %v1062, %v1061
    %v1074 = vpack.c.b16 %v1064, %v1063
    %v1075 = vpack.c.b16 %v1066, %v1065
    %v1076 = vpack.c.b16 %v1068, %v1067
    %1085 = vmatprep.subr.bf16.mxu0 0
    %1086 = vmatpush1.bf16.msra.mxu0 %v1069
    %1087 = vmatprep.subr.bf16.mxu0 0
    %1088 = vmatpush1.bf16.msra.mxu0 %v1070
    %1089 = vmatprep.subr.bf16.mxu0 0
    %1090 = vmatpush1.bf16.msra.mxu0 %v1071
    %1091 = vmatprep.subr.bf16.mxu0 0
    %1092 = vmatpush1.bf16.msra.mxu0 %v1072
    %1093 = vmatprep.subr.bf16.mxu0 0
    %1094 = vmatpush1.bf16.msra.mxu0 %v1073
    %1095 = vmatprep.subr.bf16.mxu0 0
    %1096 = vmatpush1.bf16.msra.mxu0 %v1074
    %1097 = vmatprep.subr.bf16.mxu0 0
    %1098 = vmatpush1.bf16.msra.mxu0 %v1075
    %1099 = vmatprep.subr.bf16.mxu0 0
    %1100 = vmatpush1.bf16.msra.mxu0 %v1076
    %1101 = vmatprep.subr.bf16.mxu0 0
    %1102 = vmatpush1.bf16.msra.mxu0 0
    %1103 = vmatprep.subr.bf16.mxu0 0
    %1104 = vmatpush1.bf16.msra.mxu0 0
    %1105 = vmatprep.subr.bf16.mxu0 0
    %1106 = vmatpush1.bf16.msra.mxu0 0
    %1107 = vmatprep.subr.bf16.mxu0 0
    %1108 = vmatpush1.bf16.msra.mxu0 0
    %1109 = vmatprep.subr.bf16.mxu0 0
    %1110 = vmatpush1.bf16.msra.mxu0 0
    %1111 = vmatprep.subr.bf16.mxu0 0
    %1112 = vmatpush1.bf16.msra.mxu0 0
    %1113 = vmatprep.subr.bf16.mxu0 0
    %1114 = vmatpush1.bf16.msra.mxu0 0
    %1115 = vmatprep.subr.bf16.mxu0 0
    %1116 = vmatpush1.bf16.msra.mxu0 0
    %1117 = vmatprep.mubr.bf16.mxu0 0
    %1118 = vmatmul.mubr.bf16.gmra.mrb[0].mxu0 %v1013
    %v1119 = vpop.f32.mrb[0].mxu0
    %v1120 = vadd.f32 %v1035, %v1119
    %v1121 = vpop.f32.mrb[0].mxu0
    %v1122 = vpop.f32.mrb[0].mxu0
    %v1123 = vpop.f32.mrb[0].mxu0
    %1124 = vdwg.mxu0
    %v1125 = vmul.f32 %v1120, 0.5
    %v1126 = vmul.f32 %v1125, 1.442695
    %v1127 = vpow.pop %v1126
    %v1128 = vld [vmem:[%s1] sm:$0xff]
    %1130 = vrot.lane.b32.xlu0 %v1127, 96
    %v1131 = vpop.permute.xlu0 %1130
    %v1133 = vmul.f32 %v1128, %v1131
    %v1134 = vadd.f32 %v1133, %v1120
    %v1135 = vpack.c.bf16 %v1134, %v1134
    %v1136 = vld [vmem:[%s8] sm:$0xf]
    %v1137 = vld [vmem:[%s8 + $0x4] sm:$0xf]
    %v1138 = vld [vmem:[%s8 + $0x8] sm:$0xf]
    %v1139 = vld [vmem:[%s8 + $0xc] sm:$0xf]
    %v1140 = vld [vmem:[%s9] sm:$0x1]
    %v1142 = vlaneseq
    %v1143 = vshrl.u32 %v1142, 7
    %v1144 = vsub.s32 0, %v1143
    %v1145 = vrot.slane %v1140, %v1144
    %v1151 = vunpack.c.l.b16 %v1136
    %v1152 = vunpack.c.l.b16 %v1137
    %v1153 = vunpack.c.l.b16 %v1138
    %v1154 = vunpack.c.l.b16 %v1139
    %v1155 = vpack.c.b16 %v1152, %v1151
    %v1156 = vpack.c.b16 %v1154, %v1153
    %vm1159 = vcmask 261120
    %v1161 = vsel %vm1159, %v1135, 0
    %1163 = vmatprep.subr.bf16.mxu0 0
    %1164 = vmatpush1.bf16.msra.mxu0 %v1155
    %1165 = vmatprep.subr.bf16.mxu0 0
    %1166 = vmatpush1.bf16.msra.mxu0 %v1156
    %1167 = vmatprep.subr.bf16.mxu0 0
    %1168 = vmatpush1.bf16.msra.mxu0 0
    %1169 = vmatprep.subr.bf16.mxu0 0
    %1170 = vmatpush1.bf16.msra.mxu0 0
    %1171 = vmatprep.subr.bf16.mxu0 0
    %1172 = vmatpush1.bf16.msra.mxu0 0
    %1173 = vmatprep.subr.bf16.mxu0 0
    %1174 = vmatpush1.bf16.msra.mxu0 0
    %1175 = vmatprep.subr.bf16.mxu0 0
    %1176 = vmatpush1.bf16.msra.mxu0 0
    %1177 = vmatprep.subr.bf16.mxu0 0
    %1178 = vmatpush1.bf16.msra.mxu0 0
    %1179 = vmatprep.subr.bf16.mxu0 0
    %1180 = vmatpush1.bf16.msra.mxu0 0
    %1181 = vmatprep.subr.bf16.mxu0 0
    %1182 = vmatpush1.bf16.msra.mxu0 0
    %1183 = vmatprep.subr.bf16.mxu0 0
    %1184 = vmatpush1.bf16.msra.mxu0 0
    %1185 = vmatprep.subr.bf16.mxu0 0
    %1186 = vmatpush1.bf16.msra.mxu0 0
    %1187 = vmatprep.subr.bf16.mxu0 0
    %1188 = vmatpush1.bf16.msra.mxu0 0
    %1189 = vmatprep.subr.bf16.mxu0 0
    %1190 = vmatpush1.bf16.msra.mxu0 0
    %1191 = vmatprep.subr.bf16.mxu0 0
    %1192 = vmatpush1.bf16.msra.mxu0 0
    %1193 = vmatprep.subr.bf16.mxu0 0
    %1194 = vmatpush1.bf16.msra.mxu0 0
    %1195 = vmatprep.mubr.bf16.mxu0 0
    %1196 = vmatmul.mubr.bf16.gmra.mrb[0].mxu0 %v1161
    %v1197 = vpop.f32.mrb[0].mxu0
    %v1198 = vadd.f32 %v1145, %v1197
    %v1199 = vpop.f32.mrb[0].mxu0
    %v1200 = vpop.f32.mrb[0].mxu0
    %v1201 = vpop.f32.mrb[0].mxu0
    %1202 = vdwg.mxu0
    %v1203 = vmax.f32 %v1198, 0.0
    %v1204 = vpack.c.bf16 %v1203, %v1203
    %v1205 = vld [vmem:[%s10] sm:$0xff]
    %v1206 = vld [vmem:[%s10 + $0x8] sm:$0xff]
    %v1207 = vld [vmem:[%s10 + $0x10] sm:$0xff]
    %v1208 = vld [vmem:[%s10 + $0x18] sm:$0xff]
    %v1209 = vld [vmem:[%s10 + $0x20] sm:$0xff]
    %v1210 = vld [vmem:[%s10 + $0x28] sm:$0xff]
    %v1211 = vld [vmem:[%s10 + $0x30] sm:$0xff]
    %v1212 = vld [vmem:[%s10 + $0x38] sm:$0xff]
    %v1213 = vld [vmem:[%s10 + $0x40] sm:$0xff]
    %v1214 = vld [vmem:[%s10 + $0x48] sm:$0xff]
    %v1215 = vld [vmem:[%s10 + $0x50] sm:$0xff]
    %v1216 = vld [vmem:[%s10 + $0x58] sm:$0xff]
    %v1217 = vld [vmem:[%s10 + $0x60] sm:$0xff]
    %v1218 = vld [vmem:[%s10 + $0x68] sm:$0xff]
    %v1219 = vld [vmem:[%s10 + $0x70] sm:$0xff]
    %v1220 = vld [vmem:[%s10 + $0x78] sm:$0xff]
    %v1221 = vld [vmem:[%s11] sm:$0x3]
    %v1223 = vlaneseq
    %v1224 = vshrl.u32 %v1223, 7
    %v1225 = vsub.s32 0, %v1224
    %v1226 = vrot.slane %v1221, %v1225
    %v1227 = vlaneseq
    %v1228 = vshrl.u32 %v1227, 7
    %v1229 = vsub.s32 1, %v1228
    %v1230 = vrot.slane %v1221, %v1229
    %v1249 = vunpack.c.l.b16 %v1205
    %v1250 = vunpack.c.h.b16 %v1205
    %v1251 = vunpack.c.l.b16 %v1206
    %v1252 = vunpack.c.h.b16 %v1206
    %v1253 = vunpack.c.l.b16 %v1207
    %v1254 = vunpack.c.h.b16 %v1207
    %v1255 = vunpack.c.l.b16 %v1208
    %v1256 = vunpack.c.h.b16 %v1208
    %v1257 = vunpack.c.l.b16 %v1209
    %v1258 = vunpack.c.h.b16 %v1209
    %v1259 = vunpack.c.l.b16 %v1210
    %v1260 = vunpack.c.h.b16 %v1210
    %v1261 = vunpack.c.l.b16 %v1211
    %v1262 = vunpack.c.h.b16 %v1211
    %v1263 = vunpack.c.l.b16 %v1212
    %v1264 = vunpack.c.h.b16 %v1212
    %v1265 = vunpack.c.l.b16 %v1213
    %v1266 = vunpack.c.h.b16 %v1213
    %v1267 = vunpack.c.l.b16 %v1214
    %v1268 = vunpack.c.h.b16 %v1214
    %v1269 = vunpack.c.l.b16 %v1215
    %v1270 = vunpack.c.h.b16 %v1215
    %v1271 = vunpack.c.l.b16 %v1216
    %v1272 = vunpack.c.h.b16 %v1216
    %v1273 = vunpack.c.l.b16 %v1217
    %v1274 = vunpack.c.h.b16 %v1217
    %v1275 = vunpack.c.l.b16 %v1218
    %v1276 = vunpack.c.h.b16 %v1218
    %v1277 = vunpack.c.l.b16 %v1219
    %v1278 = vunpack.c.h.b16 %v1219
    %v1279 = vunpack.c.l.b16 %v1220
    %v1280 = vunpack.c.h.b16 %v1220
    %v1281 = vpack.c.b16 %v1251, %v1249
    %v1282 = vpack.c.b16 %v1252, %v1250
    %v1283 = vpack.c.b16 %v1255, %v1253
    %v1284 = vpack.c.b16 %v1256, %v1254
    %v1285 = vpack.c.b16 %v1259, %v1257
    %v1286 = vpack.c.b16 %v1260, %v1258
    %v1287 = vpack.c.b16 %v1263, %v1261
    %v1288 = vpack.c.b16 %v1264, %v1262
    %v1289 = vpack.c.b16 %v1267, %v1265
    %v1290 = vpack.c.b16 %v1268, %v1266
    %v1291 = vpack.c.b16 %v1271, %v1269
    %v1292 = vpack.c.b16 %v1272, %v1270
    %v1293 = vpack.c.b16 %v1275, %v1273
    %v1294 = vpack.c.b16 %v1276, %v1274
    %v1295 = vpack.c.b16 %v1279, %v1277
    %v1296 = vpack.c.b16 %v1280, %v1278
    %1313 = vmatprep.subr.bf16.mxu0 %v1282
    %1314 = vmatpush1.bf16.msra.mxu0 %v1281
    %1315 = vmatprep.subr.bf16.mxu0 %v1284
    %1316 = vmatpush1.bf16.msra.mxu0 %v1283
    %1317 = vmatprep.subr.bf16.mxu0 %v1286
    %1318 = vmatpush1.bf16.msra.mxu0 %v1285
    %1319 = vmatprep.subr.bf16.mxu0 %v1288
    %1320 = vmatpush1.bf16.msra.mxu0 %v1287
    %1321 = vmatprep.subr.bf16.mxu0 %v1290
    %1322 = vmatpush1.bf16.msra.mxu0 %v1289
    %1323 = vmatprep.subr.bf16.mxu0 %v1292
    %1324 = vmatpush1.bf16.msra.mxu0 %v1291
    %1325 = vmatprep.subr.bf16.mxu0 %v1294
    %1326 = vmatpush1.bf16.msra.mxu0 %v1293
    %1327 = vmatprep.subr.bf16.mxu0 %v1296
    %1328 = vmatpush1.bf16.msra.mxu0 %v1295
    %1329 = vmatprep.subr.bf16.mxu0 0
    %1330 = vmatpush1.bf16.msra.mxu0 0
    %1331 = vmatprep.subr.bf16.mxu0 0
    %1332 = vmatpush1.bf16.msra.mxu0 0
    %1333 = vmatprep.subr.bf16.mxu0 0
    %1334 = vmatpush1.bf16.msra.mxu0 0
    %1335 = vmatprep.subr.bf16.mxu0 0
    %1336 = vmatpush1.bf16.msra.mxu0 0
    %1337 = vmatprep.subr.bf16.mxu0 0
    %1338 = vmatpush1.bf16.msra.mxu0 0
    %1339 = vmatprep.subr.bf16.mxu0 0
    %1340 = vmatpush1.bf16.msra.mxu0 0
    %1341 = vmatprep.subr.bf16.mxu0 0
    %1342 = vmatpush1.bf16.msra.mxu0 0
    %1343 = vmatprep.subr.bf16.mxu0 0
    %1344 = vmatpush1.bf16.msra.mxu0 0
    %1345 = vmatprep.mubr.bf16.mxu0 0
    %1346 = vmatmul.mubr.bf16.gmra.mrb[0].mxu0 %v1204
    %v1347 = vpop.f32.mrb[0].mxu0
    %v1348 = vadd.f32 %v1226, %v1347
    %v1349 = vpop.f32.mrb[0].mxu0
    %v1350 = vadd.f32 %v1230, %v1349
    %v1351 = vpop.f32.mrb[0].mxu0
    %v1352 = vpop.f32.mrb[0].mxu0
    %1353 = vdwg.mxu0
    %v1354 = vmax.f32 %v1348, 0.0
    %v1355 = vmax.f32 %v1350, 0.0
    %v1356 = vpack.c.bf16 %v1354, %v1354
    %v1357 = vpack.c.bf16 %v1355, %v1355
    %v1358 = vld [vmem:[%s12] sm:$0xff]
    %v1359 = vld [vmem:[%s12 + $0x8] sm:$0xff]
    %v1360 = vld [vmem:[%s12 + $0x10] sm:$0xff]
    %v1361 = vld [vmem:[%s12 + $0x18] sm:$0xf]
    %v1362 = vld [vmem:[%s12 + $0x1c] sm:$0xff]
    %v1363 = vld [vmem:[%s12 + $0x24] sm:$0xff]
    %v1364 = vld [vmem:[%s12 + $0x2c] sm:$0xff]
    %v1365 = vld [vmem:[%s12 + $0x34] sm:$0xf]
    %v1366 = vld [vmem:[%s12 + $0x38] sm:$0xff]
    %v1367 = vld [vmem:[%s12 + $0x40] sm:$0xff]
    %v1368 = vld [vmem:[%s12 + $0x48] sm:$0xff]
    %v1369 = vld [vmem:[%s12 + $0x50] sm:$0xf]
    %v1370 = vld [vmem:[%s12 + $0x54] sm:$0xff]
    %v1371 = vld [vmem:[%s12 + $0x5c] sm:$0xff]
    %v1372 = vld [vmem:[%s12 + $0x64] sm:$0xff]
    %v1373 = vld [vmem:[%s12 + $0x6c] sm:$0xf]
    %v1374 = vld [vmem:[%s12 + $0x70] sm:$0xff]
    %v1375 = vld [vmem:[%s12 + $0x78] sm:$0xff]
    %v1376 = vld [vmem:[%s12 + $0x80] sm:$0xff]
    %v1377 = vld [vmem:[%s12 + $0x88] sm:$0xf]
    %v1378 = vld [vmem:[%s12 + $0x8c] sm:$0xff]
    %v1379 = vld [vmem:[%s12 + $0x94] sm:$0xff]
    %v1380 = vld [vmem:[%s12 + $0x9c] sm:$0xff]
    %v1381 = vld [vmem:[%s12 + $0xa4] sm:$0xf]
    %v1382 = vld [vmem:[%s12 + $0xa8] sm:$0xff]
    %v1383 = vld [vmem:[%s12 + $0xb0] sm:$0xff]
    %v1384 = vld [vmem:[%s12 + $0xb8] sm:$0xff]
    %v1385 = vld [vmem:[%s12 + $0xc0] sm:$0xf]
    %v1386 = vld [vmem:[%s12 + $0xc4] sm:$0xff]
    %v1387 = vld [vmem:[%s12 + $0xcc] sm:$0xff]
    %v1388 = vld [vmem:[%s12 + $0xd4] sm:$0xff]
    %v1389 = vld [vmem:[%s12 + $0xdc] sm:$0xf]
    %v1390 = vld [vmem:[%s12 + $0xe0] sm:$0xff]
    %v1391 = vld [vmem:[%s12 + $0xe8] sm:$0xff]
    %v1392 = vld [vmem:[%s12 + $0xf0] sm:$0xff]
    %v1393 = vld [vmem:[%s12 + $0xf8] sm:$0xf]
    %v1394 = vld [vmem:[%s12 + $0xfc] sm:$0xff]
    %v1395 = vld [vmem:[%s12 + $0x104] sm:$0xff]
    %v1396 = vld [vmem:[%s12 + $0x10c] sm:$0xff]
    %v1397 = vld [vmem:[%s12 + $0x114] sm:$0xf]
    %v1398 = vld [vmem:[%s12 + $0x118] sm:$0xff]
    %v1399 = vld [vmem:[%s12 + $0x120] sm:$0xff]
    %v1400 = vld [vmem:[%s12 + $0x128] sm:$0xff]
    %v1401 = vld [vmem:[%s12 + $0x130] sm:$0xf]
    %v1402 = vld [vmem:[%s12 + $0x134] sm:$0xff]
    %v1403 = vld [vmem:[%s12 + $0x13c] sm:$0xff]
    %v1404 = vld [vmem:[%s12 + $0x144] sm:$0xff]
    %v1405 = vld [vmem:[%s12 + $0x14c] sm:$0xf]
    %v1406 = vld [vmem:[%s12 + $0x150] sm:$0xff]
    %v1407 = vld [vmem:[%s12 + $0x158] sm:$0xff]
    %v1408 = vld [vmem:[%s12 + $0x160] sm:$0xff]
    %v1409 = vld [vmem:[%s12 + $0x168] sm:$0xf]
    %v1410 = vld [vmem:[%s12 + $0x16c] sm:$0xff]
    %v1411 = vld [vmem:[%s12 + $0x174] sm:$0xff]
    %v1412 = vld [vmem:[%s12 + $0x17c] sm:$0xff]
    %v1413 = vld [vmem:[%s12 + $0x184] sm:$0xf]
    %v1414 = vld [vmem:[%s12 + $0x188] sm:$0xff]
    %v1415 = vld [vmem:[%s12 + $0x190] sm:$0xff]
    %v1416 = vld [vmem:[%s12 + $0x198] sm:$0xff]
    %v1417 = vld [vmem:[%s12 + $0x1a0] sm:$0xf]
    %v1418 = vld [vmem:[%s12 + $0x1a4] sm:$0xff]
    %v1419 = vld [vmem:[%s12 + $0x1ac] sm:$0xff]
    %v1420 = vld [vmem:[%s12 + $0x1b4] sm:$0xff]
    %v1421 = vld [vmem:[%s12 + $0x1bc] sm:$0xf]
    %v1422 = vld [vmem:[%s12 + $0x1c0] sm:$0xff]
    %v1423 = vld [vmem:[%s12 + $0x1c8] sm:$0xff]
    %v1424 = vld [vmem:[%s12 + $0x1d0] sm:$0xff]
    %v1425 = vld [vmem:[%s12 + $0x1d8] sm:$0xf]
    %v1426 = vld [vmem:[%s12 + $0x1dc] sm:$0xff]
    %v1427 = vld [vmem:[%s12 + $0x1e4] sm:$0xff]
    %v1428 = vld [vmem:[%s12 + $0x1ec] sm:$0xff]
    %v1429 = vld [vmem:[%s12 + $0x1f4] sm:$0xf]
    %v1430 = vld [vmem:[%s12 + $0x1f8] sm:$0xff]
    %v1431 = vld [vmem:[%s12 + $0x200] sm:$0xff]
    %v1432 = vld [vmem:[%s12 + $0x208] sm:$0xff]
    %v1433 = vld [vmem:[%s12 + $0x210] sm:$0xf]
    %v1434 = vld [vmem:[%s12 + $0x214] sm:$0xff]
    %v1435 = vld [vmem:[%s12 + $0x21c] sm:$0xff]
    %v1436 = vld [vmem:[%s12 + $0x224] sm:$0xff]
    %v1437 = vld [vmem:[%s12 + $0x22c] sm:$0xf]
    %v1438 = vld [vmem:[%s12 + $0x230] sm:$0xff]
    %v1439 = vld [vmem:[%s12 + $0x238] sm:$0xff]
    %v1440 = vld [vmem:[%s12 + $0x240] sm:$0xff]
    %v1441 = vld [vmem:[%s12 + $0x248] sm:$0xf]
    %v1442 = vld [vmem:[%s12 + $0x24c] sm:$0xff]
    %v1443 = vld [vmem:[%s12 + $0x254] sm:$0xff]
    %v1444 = vld [vmem:[%s12 + $0x25c] sm:$0xff]
    %v1445 = vld [vmem:[%s12 + $0x264] sm:$0xf]
    %v1446 = vld [vmem:[%s12 + $0x268] sm:$0xff]
    %v1447 = vld [vmem:[%s12 + $0x270] sm:$0xff]
    %v1448 = vld [vmem:[%s12 + $0x278] sm:$0xff]
    %v1449 = vld [vmem:[%s12 + $0x280] sm:$0xf]
    %v1450 = vld [vmem:[%s12 + $0x284] sm:$0xff]
    %v1451 = vld [vmem:[%s12 + $0x28c] sm:$0xff]
    %v1452 = vld [vmem:[%s12 + $0x294] sm:$0xff]
    %v1453 = vld [vmem:[%s12 + $0x29c] sm:$0xf]
    %v1454 = vld [vmem:[%s12 + $0x2a0] sm:$0xff]
    %v1455 = vld [vmem:[%s12 + $0x2a8] sm:$0xff]
    %v1456 = vld [vmem:[%s12 + $0x2b0] sm:$0xff]
    %v1457 = vld [vmem:[%s12 + $0x2b8] sm:$0xf]
    %v1458 = vld [vmem:[%s12 + $0x2bc] sm:$0xff]
    %v1459 = vld [vmem:[%s12 + $0x2c4] sm:$0xff]
    %v1460 = vld [vmem:[%s12 + $0x2cc] sm:$0xff]
    %v1461 = vld [vmem:[%s12 + $0x2d4] sm:$0xf]
    %v1462 = vld [vmem:[%s12 + $0x2d8] sm:$0xff]
    %v1463 = vld [vmem:[%s12 + $0x2e0] sm:$0xff]
    %v1464 = vld [vmem:[%s12 + $0x2e8] sm:$0xff]
    %v1465 = vld [vmem:[%s12 + $0x2f0] sm:$0xf]
    %v1466 = vld [vmem:[%s12 + $0x2f4] sm:$0xff]
    %v1467 = vld [vmem:[%s12 + $0x2fc] sm:$0xff]
    %v1468 = vld [vmem:[%s12 + $0x304] sm:$0xff]
    %v1469 = vld [vmem:[%s12 + $0x30c] sm:$0xf]
    %v1470 = vld [vmem:[%s12 + $0x310] sm:$0xff]
    %v1471 = vld [vmem:[%s12 + $0x318] sm:$0xff]
    %v1472 = vld [vmem:[%s12 + $0x320] sm:$0xff]
    %v1473 = vld [vmem:[%s12 + $0x328] sm:$0xf]
    %v1474 = vld [vmem:[%s12 + $0x32c] sm:$0xff]
    %v1475 = vld [vmem:[%s12 + $0x334] sm:$0xff]
    %v1476 = vld [vmem:[%s12 + $0x33c] sm:$0xff]
    %v1477 = vld [vmem:[%s12 + $0x344] sm:$0xf]
    %v1478 = vld [vmem:[%s12 + $0x348] sm:$0xff]
    %v1479 = vld [vmem:[%s12 + $0x350] sm:$0xff]
    %v1480 = vld [vmem:[%s12 + $0x358] sm:$0xff]
    %v1481 = vld [vmem:[%s12 + $0x360] sm:$0xf]
    %v1482 = vld [vmem:[%s12 + $0x364] sm:$0xff]
    %v1483 = vld [vmem:[%s12 + $0x36c] sm:$0xff]
    %v1484 = vld [vmem:[%s12 + $0x374] sm:$0xff]
    %v1485 = vld [vmem:[%s12 + $0x37c] sm:$0xf]
    %v1486 = vld [vmem:[%s13] sm:$0x7f]
    %v1488 = vlaneseq
    %v1489 = vshrl.u32 %v1488, 7
    %v1490 = vsub.s32 0, %v1489
    %v1491 = vrot.slane %v1486, %v1490
    %v1492 = vlaneseq
    %v1493 = vshrl.u32 %v1492, 7
    %v1494 = vsub.s32 1, %v1493
    %v1495 = vrot.slane %v1486, %v1494
    %v1496 = vlaneseq
    %v1497 = vshrl.u32 %v1496, 7
    %v1498 = vsub.s32 2, %v1497
    %v1499 = vrot.slane %v1486, %v1498
    %v1500 = vlaneseq
    %v1501 = vshrl.u32 %v1500, 7
    %v1502 = vsub.s32 3, %v1501
    %v1503 = vrot.slane %v1486, %v1502
    %v1504 = vlaneseq
    %v1505 = vshrl.u32 %v1504, 7
    %v1506 = vsub.s32 4, %v1505
    %v1507 = vrot.slane %v1486, %v1506
    %v1508 = vlaneseq
    %v1509 = vshrl.u32 %v1508, 7
    %v1510 = vsub.s32 5, %v1509
    %v1511 = vrot.slane %v1486, %v1510
    %v1512 = vlaneseq
    %v1513 = vshrl.u32 %v1512, 7
    %v1514 = vsub.s32 6, %v1513
    %v1515 = vrot.slane %v1486, %v1514
    %v1651 = vunpack.c.l.b16 %v1358
    %v1652 = vunpack.c.h.b16 %v1358
    %v1653 = vunpack.c.l.b16 %v1359
    %v1654 = vunpack.c.h.b16 %v1359
    %v1655 = vunpack.c.l.b16 %v1360
    %v1656 = vunpack.c.h.b16 %v1360
    %v1657 = vunpack.c.l.b16 %v1361
    %v1658 = vunpack.c.l.b16 %v1362
    %v1659 = vunpack.c.h.b16 %v1362
    %v1660 = vunpack.c.l.b16 %v1363
    %v1661 = vunpack.c.h.b16 %v1363
    %v1662 = vunpack.c.l.b16 %v1364
    %v1663 = vunpack.c.h.b16 %v1364
    %v1664 = vunpack.c.l.b16 %v1365
    %v1665 = vunpack.c.l.b16 %v1366
    %v1666 = vunpack.c.h.b16 %v1366
    %v1667 = vunpack.c.l.b16 %v1367
    %v1668 = vunpack.c.h.b16 %v1367
    %v1669 = vunpack.c.l.b16 %v1368
    %v1670 = vunpack.c.h.b16 %v1368
    %v1671 = vunpack.c.l.b16 %v1369
    %v1672 = vunpack.c.l.b16 %v1370
    %v1673 = vunpack.c.h.b16 %v1370
    %v1674 = vunpack.c.l.b16 %v1371
    %v1675 = vunpack.c.h.b16 %v1371
    %v1676 = vunpack.c.l.b16 %v1372
    %v1677 = vunpack.c.h.b16 %v1372
    %v1678 = vunpack.c.l.b16 %v1373
    %v1679 = vunpack.c.l.b16 %v1374
    %v1680 = vunpack.c.h.b16 %v1374
    %v1681 = vunpack.c.l.b16 %v1375
    %v1682 = vunpack.c.h.b16 %v1375
    %v1683 = vunpack.c.l.b16 %v1376
    %v1684 = vunpack.c.h.b16 %v1376
    %v1685 = vunpack.c.l.b16 %v1377
    %v1686 = vunpack.c.l.b16 %v1378
    %v1687 = vunpack.c.h.b16 %v1378
    %v1688 = vunpack.c.l.b16 %v1379
    %v1689 = vunpack.c.h.b16 %v1379
    %v1690 = vunpack.c.l.b16 %v1380
    %v1691 = vunpack.c.h.b16 %v1380
    %v1692 = vunpack.c.l.b16 %v1381
    %v1693 = vunpack.c.l.b16 %v1382
    %v1694 = vunpack.c.h.b16 %v1382
    %v1695 = vunpack.c.l.b16 %v1383
    %v1696 = vunpack.c.h.b16 %v1383
    %v1697 = vunpack.c.l.b16 %v1384
    %v1698 = vunpack.c.h.b16 %v1384
    %v1699 = vunpack.c.l.b16 %v1385
    %v1700 = vunpack.c.l.b16 %v1386
    %v1701 = vunpack.c.h.b16 %v1386
    %v1702 = vunpack.c.l.b16 %v1387
    %v1703 = vunpack.c.h.b16 %v1387
    %v1704 = vunpack.c.l.b16 %v1388
    %v1705 = vunpack.c.h.b16 %v1388
    %v1706 = vunpack.c.l.b16 %v1389
    %v1707 = vunpack.c.l.b16 %v1390
    %v1708 = vunpack.c.h.b16 %v1390
    %v1709 = vunpack.c.l.b16 %v1391
    %v1710 = vunpack.c.h.b16 %v1391
    %v1711 = vunpack.c.l.b16 %v1392
    %v1712 = vunpack.c.h.b16 %v1392
    %v1713 = vunpack.c.l.b16 %v1393
    %v1714 = vunpack.c.l.b16 %v1394
    %v1715 = vunpack.c.h.b16 %v1394
    %v1716 = vunpack.c.l.b16 %v1395
    %v1717 = vunpack.c.h.b16 %v1395
    %v1718 = vunpack.c.l.b16 %v1396
    %v1719 = vunpack.c.h.b16 %v1396
    %v1720 = vunpack.c.l.b16 %v1397
    %v1721 = vunpack.c.l.b16 %v1398
    %v1722 = vunpack.c.h.b16 %v1398
    %v1723 = vunpack.c.l.b16 %v1399
    %v1724 = vunpack.c.h.b16 %v1399
    %v1725 = vunpack.c.l.b16 %v1400
    %v1726 = vunpack.c.h.b16 %v1400
    %v1727 = vunpack.c.l.b16 %v1401
    %v1728 = vunpack.c.l.b16 %v1402
    %v1729 = vunpack.c.h.b16 %v1402
    %v1730 = vunpack.c.l.b16 %v1403
    %v1731 = vunpack.c.h.b16 %v1403
    %v1732 = vunpack.c.l.b16 %v1404
    %v1733 = vunpack.c.h.b16 %v1404
    %v1734 = vunpack.c.l.b16 %v1405
    %v1735 = vunpack.c.l.b16 %v1406
    %v1736 = vunpack.c.h.b16 %v1406
    %v1737 = vunpack.c.l.b16 %v1407
    %v1738 = vunpack.c.h.b16 %v1407
    %v1739 = vunpack.c.l.b16 %v1408
    %v1740 = vunpack.c.h.b16 %v1408
    %v1741 = vunpack.c.l.b16 %v1409
    %v1742 = vunpack.c.l.b16 %v1410
    %v1743 = vunpack.c.h.b16 %v1410
    %v1744 = vunpack.c.l.b16 %v1411
    %v1745 = vunpack.c.h.b16 %v1411
    %v1746 = vunpack.c.l.b16 %v1412
    %v1747 = vunpack.c.h.b16 %v1412
    %v1748 = vunpack.c.l.b16 %v1413
    %v1749 = vunpack.c.l.b16 %v1414
    %v1750 = vunpack.c.h.b16 %v1414
    %v1751 = vunpack.c.l.b16 %v1415
    %v1752 = vunpack.c.h.b16 %v1415
    %v1753 = vunpack.c.l.b16 %v1416
    %v1754 = vunpack.c.h.b16 %v1416
    %v1755 = vunpack.c.l.b16 %v1417
    %v1756 = vunpack.c.l.b16 %v1418
    %v1757 = vunpack.c.h.b16 %v1418
    %v1758 = vunpack.c.l.b16 %v1419
    %v1759 = vunpack.c.h.b16 %v1419
    %v1760 = vunpack.c.l.b16 %v1420
    %v1761 = vunpack.c.h.b16 %v1420
    %v1762 = vunpack.c.l.b16 %v1421
    %v1763 = vunpack.c.l.b16 %v1422
    %v1764 = vunpack.c.h.b16 %v1422
    %v1765 = vunpack.c.l.b16 %v1423
    %v1766 = vunpack.c.h.b16 %v1423
    %v1767 = vunpack.c.l.b16 %v1424
    %v1768 = vunpack.c.h.b16 %v1424
    %v1769 = vunpack.c.l.b16 %v1425
    %v1770 = vunpack.c.l.b16 %v1426
    %v1771 = vunpack.c.h.b16 %v1426
    %v1772 = vunpack.c.l.b16 %v1427
    %v1773 = vunpack.c.h.b16 %v1427
    %v1774 = vunpack.c.l.b16 %v1428
    %v1775 = vunpack.c.h.b16 %v1428
    %v1776 = vunpack.c.l.b16 %v1429
    %v1777 = vunpack.c.l.b16 %v1430
    %v1778 = vunpack.c.h.b16 %v1430
    %v1779 = vunpack.c.l.b16 %v1431
    %v1780 = vunpack.c.h.b16 %v1431
    %v1781 = vunpack.c.l.b16 %v1432
    %v1782 = vunpack.c.h.b16 %v1432
    %v1783 = vunpack.c.l.b16 %v1433
    %v1784 = vunpack.c.l.b16 %v1434
    %v1785 = vunpack.c.h.b16 %v1434
    %v1786 = vunpack.c.l.b16 %v1435
    %v1787 = vunpack.c.h.b16 %v1435
    %v1788 = vunpack.c.l.b16 %v1436
    %v1789 = vunpack.c.h.b16 %v1436
    %v1790 = vunpack.c.l.b16 %v1437
    %v1791 = vunpack.c.l.b16 %v1438
    %v1792 = vunpack.c.h.b16 %v1438
    %v1793 = vunpack.c.l.b16 %v1439
    %v1794 = vunpack.c.h.b16 %v1439
    %v1795 = vunpack.c.l.b16 %v1440
    %v1796 = vunpack.c.h.b16 %v1440
    %v1797 = vunpack.c.l.b16 %v1441
    %v1798 = vunpack.c.l.b16 %v1442
    %v1799 = vunpack.c.h.b16 %v1442
    %v1800 = vunpack.c.l.b16 %v1443
    %v1801 = vunpack.c.h.b16 %v1443
    %v1802 = vunpack.c.l.b16 %v1444
    %v1803 = vunpack.c.h.b16 %v1444
    %v1804 = vunpack.c.l.b16 %v1445
    %v1805 = vunpack.c.l.b16 %v1446
    %v1806 = vunpack.c.h.b16 %v1446
    %v1807 = vunpack.c.l.b16 %v1447
    %v1808 = vunpack.c.h.b16 %v1447
    %v1809 = vunpack.c.l.b16 %v1448
    %v1810 = vunpack.c.h.b16 %v1448
    %v1811 = vunpack.c.l.b16 %v1449
    %v1812 = vunpack.c.l.b16 %v1450
    %v1813 = vunpack.c.h.b16 %v1450
    %v1814 = vunpack.c.l.b16 %v1451
    %v1815 = vunpack.c.h.b16 %v1451
    %v1816 = vunpack.c.l.b16 %v1452
    %v1817 = vunpack.c.h.b16 %v1452
    %v1818 = vunpack.c.l.b16 %v1453
    %v1819 = vunpack.c.l.b16 %v1454
    %v1820 = vunpack.c.h.b16 %v1454
    %v1821 = vunpack.c.l.b16 %v1455
    %v1822 = vunpack.c.h.b16 %v1455
    %v1823 = vunpack.c.l.b16 %v1456
    %v1824 = vunpack.c.h.b16 %v1456
    %v1825 = vunpack.c.l.b16 %v1457
    %v1826 = vunpack.c.l.b16 %v1458
    %v1827 = vunpack.c.h.b16 %v1458
    %v1828 = vunpack.c.l.b16 %v1459
    %v1829 = vunpack.c.h.b16 %v1459
    %v1830 = vunpack.c.l.b16 %v1460
    %v1831 = vunpack.c.h.b16 %v1460
    %v1832 = vunpack.c.l.b16 %v1461
    %v1833 = vunpack.c.l.b16 %v1462
    %v1834 = vunpack.c.h.b16 %v1462
    %v1835 = vunpack.c.l.b16 %v1463
    %v1836 = vunpack.c.h.b16 %v1463
    %v1837 = vunpack.c.l.b16 %v1464
    %v1838 = vunpack.c.h.b16 %v1464
    %v1839 = vunpack.c.l.b16 %v1465
    %v1840 = vunpack.c.l.b16 %v1466
    %v1841 = vunpack.c.h.b16 %v1466
    %v1842 = vunpack.c.l.b16 %v1467
    %v1843 = vunpack.c.h.b16 %v1467
    %v1844 = vunpack.c.l.b16 %v1468
    %v1845 = vunpack.c.h.b16 %v1468
    %v1846 = vunpack.c.l.b16 %v1469
    %v1847 = vunpack.c.l.b16 %v1470
    %v1848 = vunpack.c.h.b16 %v1470
    %v1849 = vunpack.c.l.b16 %v1471
    %v1850 = vunpack.c.h.b16 %v1471
    %v1851 = vunpack.c.l.b16 %v1472
    %v1852 = vunpack.c.h.b16 %v1472
    %v1853 = vunpack.c.l.b16 %v1473
    %v1854 = vunpack.c.l.b16 %v1474
    %v1855 = vunpack.c.h.b16 %v1474
    %v1856 = vunpack.c.l.b16 %v1475
    %v1857 = vunpack.c.h.b16 %v1475
    %v1858 = vunpack.c.l.b16 %v1476
    %v1859 = vunpack.c.h.b16 %v1476
    %v1860 = vunpack.c.l.b16 %v1477
    %v1861 = vunpack.c.l.b16 %v1478
    %v1862 = vunpack.c.h.b16 %v1478
    %v1863 = vunpack.c.l.b16 %v1479
    %v1864 = vunpack.c.h.b16 %v1479
    %v1865 = vunpack.c.l.b16 %v1480
    %v1866 = vunpack.c.h.b16 %v1480
    %v1867 = vunpack.c.l.b16 %v1481
    %v1868 = vunpack.c.l.b16 %v1482
    %v1869 = vunpack.c.h.b16 %v1482
    %v1870 = vunpack.c.l.b16 %v1483
    %v1871 = vunpack.c.h.b16 %v1483
    %v1872 = vunpack.c.l.b16 %v1484
    %v1873 = vunpack.c.h.b16 %v1484
    %v1874 = vunpack.c.l.b16 %v1485
    %v1875 = vpack.c.b16 %v1658, %v1651
    %v1876 = vpack.c.b16 %v1659, %v1652
    %v1877 = vpack.c.b16 %v1660, %v1653
    %v1878 = vpack.c.b16 %v1661, %v1654
    %v1879 = vpack.c.b16 %v1662, %v1655
    %v1880 = vpack.c.b16 %v1663, %v1656
    %v1881 = vpack.c.b16 %v1664, %v1657
    %v1882 = vpack.c.b16 %v1672, %v1665
    %v1883 = vpack.c.b16 %v1673, %v1666
    %v1884 = vpack.c.b16 %v1674, %v1667
    %v1885 = vpack.c.b16 %v1675, %v1668
    %v1886 = vpack.c.b16 %v1676, %v1669
    %v1887 = vpack.c.b16 %v1677, %v1670
    %v1888 = vpack.c.b16 %v1678, %v1671
    %v1889 = vpack.c.b16 %v1686, %v1679
    %v1890 = vpack.c.b16 %v1687, %v1680
    %v1891 = vpack.c.b16 %v1688, %v1681
    %v1892 = vpack.c.b16 %v1689, %v1682
    %v1893 = vpack.c.b16 %v1690, %v1683
    %v1894 = vpack.c.b16 %v1691, %v1684
    %v1895 = vpack.c.b16 %v1692, %v1685
    %v1896 = vpack.c.b16 %v1700, %v1693
    %v1897 = vpack.c.b16 %v1701, %v1694
    %v1898 = vpack.c.b16 %v1702, %v1695
    %v1899 = vpack.c.b16 %v1703, %v1696
    %v1900 = vpack.c.b16 %v1704, %v1697
    %v1901 = vpack.c.b16 %v1705, %v1698
    %v1902 = vpack.c.b16 %v1706, %v1699
    %v1903 = vpack.c.b16 %v1714, %v1707
    %v1904 = vpack.c.b16 %v1715, %v1708
    %v1905 = vpack.c.b16 %v1716, %v1709
    %v1906 = vpack.c.b16 %v1717, %v1710
    %v1907 = vpack.c.b16 %v1718, %v1711
    %v1908 = vpack.c.b16 %v1719, %v1712
    %v1909 = vpack.c.b16 %v1720, %v1713
    %v1910 = vpack.c.b16 %v1728, %v1721
    %v1911 = vpack.c.b16 %v1729, %v1722
    %v1912 = vpack.c.b16 %v1730, %v1723
    %v1913 = vpack.c.b16 %v1731, %v1724
    %v1914 = vpack.c.b16 %v1732, %v1725
    %v1915 = vpack.c.b16 %v1733, %v1726
    %v1916 = vpack.c.b16 %v1734, %v1727
    %v1917 = vpack.c.b16 %v1742, %v1735
    %v1918 = vpack.c.b16 %v1743, %v1736
    %v1919 = vpack.c.b16 %v1744, %v1737
    %v1920 = vpack.c.b16 %v1745, %v1738
    %v1921 = vpack.c.b16 %v1746, %v1739
    %v1922 = vpack.c.b16 %v1747, %v1740
    %v1923 = vpack.c.b16 %v1748, %v1741
    %v1924 = vpack.c.b16 %v1756, %v1749
    %v1925 = vpack.c.b16 %v1757, %v1750
    %v1926 = vpack.c.b16 %v1758, %v1751
    %v1927 = vpack.c.b16 %v1759, %v1752
    %v1928 = vpack.c.b16 %v1760, %v1753
    %v1929 = vpack.c.b16 %v1761, %v1754
    %v1930 = vpack.c.b16 %v1762, %v1755
    %v1931 = vpack.c.b16 %v1770, %v1763
    %v1932 = vpack.c.b16 %v1771, %v1764
    %v1933 = vpack.c.b16 %v1772, %v1765
    %v1934 = vpack.c.b16 %v1773, %v1766
    %v1935 = vpack.c.b16 %v1774, %v1767
    %v1936 = vpack.c.b16 %v1775, %v1768
    %v1937 = vpack.c.b16 %v1776, %v1769
    %v1938 = vpack.c.b16 %v1784, %v1777
    %v1939 = vpack.c.b16 %v1785, %v1778
    %v1940 = vpack.c.b16 %v1786, %v1779
    %v1941 = vpack.c.b16 %v1787, %v1780
    %v1942 = vpack.c.b16 %v1788, %v1781
    %v1943 = vpack.c.b16 %v1789, %v1782
    %v1944 = vpack.c.b16 %v1790, %v1783
    %v1945 = vpack.c.b16 %v1798, %v1791
    %v1946 = vpack.c.b16 %v1799, %v1792
    %v1947 = vpack.c.b16 %v1800, %v1793
    %v1948 = vpack.c.b16 %v1801, %v1794
    %v1949 = vpack.c.b16 %v1802, %v1795
    %v1950 = vpack.c.b16 %v1803, %v1796
    %v1951 = vpack.c.b16 %v1804, %v1797
    %v1952 = vpack.c.b16 %v1812, %v1805
    %v1953 = vpack.c.b16 %v1813, %v1806
    %v1954 = vpack.c.b16 %v1814, %v1807
    %v1955 = vpack.c.b16 %v1815, %v1808
    %v1956 = vpack.c.b16 %v1816, %v1809
    %v1957 = vpack.c.b16 %v1817, %v1810
    %v1958 = vpack.c.b16 %v1818, %v1811
    %v1959 = vpack.c.b16 %v1826, %v1819
    %v1960 = vpack.c.b16 %v1827, %v1820
    %v1961 = vpack.c.b16 %v1828, %v1821
    %v1962 = vpack.c.b16 %v1829, %v1822
    %v1963 = vpack.c.b16 %v1830, %v1823
    %v1964 = vpack.c.b16 %v1831, %v1824
    %v1965 = vpack.c.b16 %v1832, %v1825
    %v1966 = vpack.c.b16 %v1840, %v1833
    %v1967 = vpack.c.b16 %v1841, %v1834
    %v1968 = vpack.c.b16 %v1842, %v1835
    %v1969 = vpack.c.b16 %v1843, %v1836
    %v1970 = vpack.c.b16 %v1844, %v1837
    %v1971 = vpack.c.b16 %v1845, %v1838
    %v1972 = vpack.c.b16 %v1846, %v1839
    %v1973 = vpack.c.b16 %v1854, %v1847
    %v1974 = vpack.c.b16 %v1855, %v1848
    %v1975 = vpack.c.b16 %v1856, %v1849
    %v1976 = vpack.c.b16 %v1857, %v1850
    %v1977 = vpack.c.b16 %v1858, %v1851
    %v1978 = vpack.c.b16 %v1859, %v1852
    %v1979 = vpack.c.b16 %v1860, %v1853
    %v1980 = vpack.c.b16 %v1868, %v1861
    %v1981 = vpack.c.b16 %v1869, %v1862
    %v1982 = vpack.c.b16 %v1870, %v1863
    %v1983 = vpack.c.b16 %v1871, %v1864
    %v1984 = vpack.c.b16 %v1872, %v1865
    %v1985 = vpack.c.b16 %v1873, %v1866
    %v1986 = vpack.c.b16 %v1874, %v1867
    %2099 = vmatprep.subr.bf16.mxu0 %v1876
    %2100 = vmatpush1.bf16.msra.mxu0 %v1875
    %2101 = vmatprep.subr.bf16.mxu0 %v1883
    %2102 = vmatpush1.bf16.msra.mxu0 %v1882
    %2103 = vmatprep.subr.bf16.mxu0 %v1890
    %2104 = vmatpush1.bf16.msra.mxu0 %v1889
    %2105 = vmatprep.subr.bf16.mxu0 %v1897
    %2106 = vmatpush1.bf16.msra.mxu0 %v1896
    %2107 = vmatprep.subr.bf16.mxu0 %v1904
    %2108 = vmatpush1.bf16.msra.mxu0 %v1903
    %2109 = vmatprep.subr.bf16.mxu0 %v1911
    %2110 = vmatpush1.bf16.msra.mxu0 %v1910
    %2111 = vmatprep.subr.bf16.mxu0 %v1918
    %2112 = vmatpush1.bf16.msra.mxu0 %v1917
    %2113 = vmatprep.subr.bf16.mxu0 %v1925
    %2114 = vmatpush1.bf16.msra.mxu0 %v1924
    %2115 = vmatprep.subr.bf16.mxu0 %v1932
    %2116 = vmatpush1.bf16.msra.mxu0 %v1931
    %2117 = vmatprep.subr.bf16.mxu0 %v1939
    %2118 = vmatpush1.bf16.msra.mxu0 %v1938
    %2119 = vmatprep.subr.bf16.mxu0 %v1946
    %2120 = vmatpush1.bf16.msra.mxu0 %v1945
    %2121 = vmatprep.subr.bf16.mxu0 %v1953
    %2122 = vmatpush1.bf16.msra.mxu0 %v1952
    %2123 = vmatprep.subr.bf16.mxu0 %v1960
    %2124 = vmatpush1.bf16.msra.mxu0 %v1959
    %2125 = vmatprep.subr.bf16.mxu0 %v1967
    %2126 = vmatpush1.bf16.msra.mxu0 %v1966
    %2127 = vmatprep.subr.bf16.mxu0 %v1974
    %2128 = vmatpush1.bf16.msra.mxu0 %v1973
    %2129 = vmatprep.subr.bf16.mxu0 %v1981
    %2130 = vmatpush1.bf16.msra.mxu0 %v1980
    %2131 = vmatprep.mubr.bf16.mxu0 %v1357
    %2132 = vmatmul.mubr.bf16.gmra.mrb[0].mxu0 %v1356
    %v2133 = vpop.f32.mrb[0].mxu0
    %v2134 = vadd.f32 %v1491, %v2133
    %v2135 = vpop.f32.mrb[0].mxu0
    %v2136 = vadd.f32 %v1495, %v2135
    %v2137 = vpop.f32.mrb[0].mxu0
    %v2138 = vpop.f32.mrb[0].mxu0
    %2139 = vdwg.mxu0
    %2140 = vmatprep.subr.bf16.mxu0 %v1878
    %2141 = vmatpush1.bf16.msra.mxu0 %v1877
    %2142 = vmatprep.subr.bf16.mxu0 %v1885
    %2143 = vmatpush1.bf16.msra.mxu0 %v1884
    %2144 = vmatprep.subr.bf16.mxu0 %v1892
    %2145 = vmatpush1.bf16.msra.mxu0 %v1891
    %2146 = vmatprep.subr.bf16.mxu0 %v1899
    %2147 = vmatpush1.bf16.msra.mxu0 %v1898
    %2148 = vmatprep.subr.bf16.mxu0 %v1906
    %2149 = vmatpush1.bf16.msra.mxu0 %v1905
    %2150 = vmatprep.subr.bf16.mxu0 %v1913
    %2151 = vmatpush1.bf16.msra.mxu0 %v1912
    %2152 = vmatprep.subr.bf16.mxu0 %v1920
    %2153 = vmatpush1.bf16.msra.mxu0 %v1919
    %2154 = vmatprep.subr.bf16.mxu0 %v1927
    %2155 = vmatpush1.bf16.msra.mxu0 %v1926
    %2156 = vmatprep.subr.bf16.mxu0 %v1934
    %2157 = vmatpush1.bf16.msra.mxu0 %v1933
    %2158 = vmatprep.subr.bf16.mxu0 %v1941
    %2159 = vmatpush1.bf16.msra.mxu0 %v1940
    %2160 = vmatprep.subr.bf16.mxu0 %v1948
    %2161 = vmatpush1.bf16.msra.mxu0 %v1947
    %2162 = vmatprep.subr.bf16.mxu0 %v1955
    %2163 = vmatpush1.bf16.msra.mxu0 %v1954
    %2164 = vmatprep.subr.bf16.mxu0 %v1962
    %2165 = vmatpush1.bf16.msra.mxu0 %v1961
    %2166 = vmatprep.subr.bf16.mxu0 %v1969
    %2167 = vmatpush1.bf16.msra.mxu0 %v1968
    %2168 = vmatprep.subr.bf16.mxu0 %v1976
    %2169 = vmatpush1.bf16.msra.mxu0 %v1975
    %2170 = vmatprep.subr.bf16.mxu0 %v1983
    %2171 = vmatpush1.bf16.msra.mxu0 %v1982
    %2172 = vmatprep.mubr.bf16.mxu0 %v1357
    %2173 = vmatmul.mubr.bf16.gmra.mrb[0].mxu0 %v1356
    %v2174 = vpop.f32.mrb[0].mxu0
    %v2175 = vadd.f32 %v1499, %v2174
    %v2176 = vpop.f32.mrb[0].mxu0
    %v2177 = vadd.f32 %v1503, %v2176
    %v2178 = vpop.f32.mrb[0].mxu0
    %v2179 = vpop.f32.mrb[0].mxu0
    %2180 = vdwg.mxu0
    %2181 = vmatprep.subr.bf16.mxu0 %v1880
    %2182 = vmatpush1.bf16.msra.mxu0 %v1879
    %2183 = vmatprep.subr.bf16.mxu0 %v1887
    %2184 = vmatpush1.bf16.msra.mxu0 %v1886
    %2185 = vmatprep.subr.bf16.mxu0 %v1894
    %2186 = vmatpush1.bf16.msra.mxu0 %v1893
    %2187 = vmatprep.subr.bf16.mxu0 %v1901
    %2188 = vmatpush1.bf16.msra.mxu0 %v1900
    %2189 = vmatprep.subr.bf16.mxu0 %v1908
    %2190 = vmatpush1.bf16.msra.mxu0 %v1907
    %2191 = vmatprep.subr.bf16.mxu0 %v1915
    %2192 = vmatpush1.bf16.msra.mxu0 %v1914
    %2193 = vmatprep.subr.bf16.mxu0 %v1922
    %2194 = vmatpush1.bf16.msra.mxu0 %v1921
    %2195 = vmatprep.subr.bf16.mxu0 %v1929
    %2196 = vmatpush1.bf16.msra.mxu0 %v1928
    %2197 = vmatprep.subr.bf16.mxu0 %v1936
    %2198 = vmatpush1.bf16.msra.mxu0 %v1935
    %2199 = vmatprep.subr.bf16.mxu0 %v1943
    %2200 = vmatpush1.bf16.msra.mxu0 %v1942
    %2201 = vmatprep.subr.bf16.mxu0 %v1950
    %2202 = vmatpush1.bf16.msra.mxu0 %v1949
    %2203 = vmatprep.subr.bf16.mxu0 %v1957
    %2204 = vmatpush1.bf16.msra.mxu0 %v1956
    %2205 = vmatprep.subr.bf16.mxu0 %v1964
    %2206 = vmatpush1.bf16.msra.mxu0 %v1963
    %2207 = vmatprep.subr.bf16.mxu0 %v1971
    %2208 = vmatpush1.bf16.msra.mxu0 %v1970
    %2209 = vmatprep.subr.bf16.mxu0 %v1978
    %2210 = vmatpush1.bf16.msra.mxu0 %v1977
    %2211 = vmatprep.subr.bf16.mxu0 %v1985
    %2212 = vmatpush1.bf16.msra.mxu0 %v1984
    %2213 = vmatprep.mubr.bf16.mxu0 %v1357
    %2214 = vmatmul.mubr.bf16.gmra.mrb[0].mxu0 %v1356
    %v2215 = vpop.f32.mrb[0].mxu0
    %v2216 = vadd.f32 %v1507, %v2215
    %v2217 = vpop.f32.mrb[0].mxu0
    %v2218 = vadd.f32 %v1511, %v2217
    %v2219 = vpop.f32.mrb[0].mxu0
    %v2220 = vpop.f32.mrb[0].mxu0
    %2221 = vdwg.mxu0
    %2222 = vmatprep.subr.bf16.mxu0 0
    %2223 = vmatpush1.bf16.msra.mxu0 %v1881
    %2224 = vmatprep.subr.bf16.mxu0 0
    %2225 = vmatpush1.bf16.msra.mxu0 %v1888
    %2226 = vmatprep.subr.bf16.mxu0 0
    %2227 = vmatpush1.bf16.msra.mxu0 %v1895
    %2228 = vmatprep.subr.bf16.mxu0 0
    %2229 = vmatpush1.bf16.msra.mxu0 %v1902
    %2230 = vmatprep.subr.bf16.mxu0 0
    %2231 = vmatpush1.bf16.msra.mxu0 %v1909
    %2232 = vmatprep.subr.bf16.mxu0 0
    %2233 = vmatpush1.bf16.msra.mxu0 %v1916
    %2234 = vmatprep.subr.bf16.mxu0 0
    %2235 = vmatpush1.bf16.msra.mxu0 %v1923
    %2236 = vmatprep.subr.bf16.mxu0 0
    %2237 = vmatpush1.bf16.msra.mxu0 %v1930
    %2238 = vmatprep.subr.bf16.mxu0 0
    %2239 = vmatpush1.bf16.msra.mxu0 %v1937
    %2240 = vmatprep.subr.bf16.mxu0 0
    %2241 = vmatpush1.bf16.msra.mxu0 %v1944
    %2242 = vmatprep.subr.bf16.mxu0 0
    %2243 = vmatpush1.bf16.msra.mxu0 %v1951
    %2244 = vmatprep.subr.bf16.mxu0 0
    %2245 = vmatpush1.bf16.msra.mxu0 %v1958
    %2246 = vmatprep.subr.bf16.mxu0 0
    %2247 = vmatpush1.bf16.msra.mxu0 %v1965
    %2248 = vmatprep.subr.bf16.mxu0 0
    %2249 = vmatpush1.bf16.msra.mxu0 %v1972
    %2250 = vmatprep.subr.bf16.mxu0 0
    %2251 = vmatpush1.bf16.msra.mxu0 %v1979
    %2252 = vmatprep.subr.bf16.mxu0 0
    %2253 = vmatpush1.bf16.msra.mxu0 %v1986
    %2254 = vmatprep.mubr.bf16.mxu0 %v1357
    %2255 = vmatmul.mubr.bf16.gmra.mrb[0].mxu0 %v1356
    %v2256 = vpop.f32.mrb[0].mxu0
    %v2257 = vadd.f32 %v1515, %v2256
    %v2258 = vpop.f32.mrb[0].mxu0
    %v2259 = vpop.f32.mrb[0].mxu0
    %v2260 = vpop.f32.mrb[0].mxu0
    %2261 = vdwg.mxu0
    %v2262 = vsub.f32 0.0, %v2134
    %v2263 = vsub.f32 0.0, %v2136
    %v2264 = vsub.f32 0.0, %v2175
    %v2265 = vsub.f32 0.0, %v2177
    %v2266 = vsub.f32 0.0, %v2216
    %v2267 = vsub.f32 0.0, %v2218
    %v2268 = vsub.f32 0.0, %v2257
    %v2269 = vmul.f32 %v2262, 1.442695
    %v2270 = vpow.pop %v2269
    %v2271 = vmul.f32 %v2263, 1.442695
    %v2272 = vpow.pop %v2271
    %v2273 = vmul.f32 %v2264, 1.442695
    %v2274 = vpow.pop %v2273
    %v2275 = vmul.f32 %v2265, 1.442695
    %v2276 = vpow.pop %v2275
    %v2277 = vmul.f32 %v2266, 1.442695
    %v2278 = vpow.pop %v2277
    %v2279 = vmul.f32 %v2267, 1.442695
    %v2280 = vpow.pop %v2279
    %v2281 = vmul.f32 %v2268, 1.442695
    %v2282 = vpow.pop %v2281
    %v2283 = vadd.f32 %v2270, 1.0
    %v2284 = vadd.f32 %v2272, 1.0
    %v2285 = vadd.f32 %v2274, 1.0
    %v2286 = vadd.f32 %v2276, 1.0
    %v2287 = vadd.f32 %v2278, 1.0
    %v2288 = vadd.f32 %v2280, 1.0
    %v2289 = vadd.f32 %v2282, 1.0
    %v2290 = vrcp.pop %v2283
    %v2291 = vrcp.pop %v2284
    %v2292 = vrcp.pop %v2285
    %v2293 = vrcp.pop %v2286
    %v2294 = vrcp.pop %v2287
    %v2295 = vrcp.pop %v2288
    %v2296 = vrcp.pop %v2289
    %2297 = vst [vmem:[#allocation2] sm:$0xff] %v2290
    %2298 = vst [vmem:[#allocation2 + $0x8] sm:$0xff] %v2291
    %2299 = vst [vmem:[#allocation2 + $0x10] sm:$0xff] %v2292
    %2300 = vst [vmem:[#allocation2 + $0x18] sm:$0xff] %v2293
    %2301 = vst [vmem:[#allocation2 + $0x20] sm:$0xff] %v2294
    %2302 = vst [vmem:[#allocation2 + $0x28] sm:$0xff] %v2295
    %2303 = vst.msk [vmem:[#allocation2 + $0x30] sm:$0xff] %vm665, %v2296
    %2304 = vst [vmem:[%s15] sm:$0xff] %v1120
    // Predicated region
    $region58: #{vae_forward.1} parent=1 // pred_check
      _
    $region59: #{vae_forward.1} parent=1 // pred_check_branch
      %2306 = sbr.rel (0) target = $region61
    $region60: #{vae_forward.1} parent=1 // pred_region
      %s2308 = ssub.s32 896, 896
      %2309 = vsyncadd [#allocation3], %s2308
      %s2311 = sshll.u32 [#allocation2], 4
      %s2312 = int_to_ptr.vmem [resolvable:$true] %s2311
      %2314 = dma.vmem_to_hbm [thread:$0]  %s2312, 896, %s14, [#allocation3]
    $region61: #{vae_forward.1} parent=1 // pred_fallthru
      _
    // Predicated region
    $region62: #{vae_forward.1} parent=1 // pred_check
      _
    $region63: #{vae_forward.1} parent=1 // pred_check_branch
      %2316 = sbr.rel (0) target = $region65
    $region64: #{vae_forward.1} parent=1 // pred_region
      _
    $region65: #{vae_forward.1} parent=1 // pred_fallthru
      _
    // Predicated region
    $region66: #{vae_forward.1} parent=1 // pred_check
      _
    $region67: #{vae_forward.1} parent=1 // pred_check_branch
      %2318 = sbr.rel (0) target = $region69
    $region68: #{vae_forward.1} parent=1 // pred_region
      %2319 = dma.done [#allocation3], 896
    $region69: #{vae_forward.1} parent=1 // pred_fallthru
      _
    // Predicated region
    $region70: #{vae_forward.1} parent=1 // pred_check
      _
    $region71: #{vae_forward.1} parent=1 // pred_check_branch
      %2321 = sbr.rel (0) target = $region73
    $region72: #{vae_forward.1} parent=1 // pred_region
      _
    $region73: #{vae_forward.1} parent=1 // pred_fallthru
      _
    %2322 = vsyncpa [#allocation3], 1

</llo_original>
